<compile_context>
chip_gen: v7x
topology: tpu7x:2x2x1
jax: 0.10.0
libtpu: 0.0.40
codegen_flags: <defaults>
</compile_context>

<pallas_src>
import numpy as np
import jax
import jax.numpy as jnp
from jax.experimental import pallas as pl
from jax.experimental.pallas import tpu as pltpu


# ----------------------------------------------------------------------------- kernel
def _make_resblock_kernel(has_proj):
    """Kernel factory; `has_proj` selects projection vs identity shortcut."""

    def kernel(*refs):
        if has_proj:
            (xp_ref, w1_ref, w2_ref, ws_ref, bn_ref, bst_ref,
             o_ref, mid_ref) = refs
        else:
            xp_ref, w1_ref, w2_ref, bn_ref, o_ref, mid_ref = refs

        n_img, h_pad, w_cin = xp_ref.shape       # (N, H+2, W*Cin)
        H = h_pad - 2
        NH, WCout = o_ref.shape                  # rows = N*H, lanes = W*Cout
        Cout = bn_ref.shape[1]
        W = WCout // Cout
        n_samples = float(NH * W)                # N*H*W samples per channel
        eps = 1e-5

        # Channel fold / unfold selectors: lane l carries channel (l % Cout).
        #   fold   (W*Cout, Cout): per-channel reduction of a (1, W*Cout) row
        #   unfold (Cout, W*Cout): broadcast a (1, Cout) row back onto lanes
        lane = jax.lax.broadcasted_iota(jnp.int32, (WCout, Cout), 0)
        chan = jax.lax.broadcasted_iota(jnp.int32, (WCout, Cout), 1)
        fold = (lane % Cout == chan).astype(jnp.float32)
        lane_t = jax.lax.broadcasted_iota(jnp.int32, (Cout, WCout), 1)
        chan_t = jax.lax.broadcasted_iota(jnp.int32, (Cout, WCout), 0)
        unfold = (lane_t % Cout == chan_t).astype(jnp.float32)

        def conv_banded(src_ref, w_ref):
            """3x3 conv: one bf16 matmul per vertical tap vs a banded weight."""
            k_in = src_ref.shape[-1]
            acc = jnp.zeros((NH, WCout), jnp.float32)
            for ky in range(3):
                a = src_ref[:, ky:ky + H, :].reshape(NH, k_in)
                acc = acc + jnp.dot(a.astype(jnp.bfloat16), w_ref[ky],
                                    preferred_element_type=jnp.float32)
            return acc

        def batchnorm(acc, gamma, beta):
            """Train-mode BN, single pass (per-channel sum & sum-of-squares)."""
            col_s = jnp.sum(acc, axis=0, keepdims=True)            # (1, W*C)
            col_ss = jnp.sum(acc * acc, axis=0, keepdims=True)     # (1, W*C)
            ch_s = jnp.dot(col_s, fold, preferred_element_type=jnp.float32)
            ch_ss = jnp.dot(col_ss, fold, preferred_element_type=jnp.float32)
            mu = ch_s / n_samples
            var = ch_ss / n_samples - mu * mu                      # biased var
            scale_c = gamma * jax.lax.rsqrt(var + eps)             # (1, Cout)
            shift_c = beta - mu * scale_c
            scale = jnp.dot(scale_c, unfold, preferred_element_type=jnp.float32)
            shift = jnp.dot(shift_c, unfold, preferred_element_type=jnp.float32)
            return acc * scale + shift                             # fused MAD

        bnp = bn_ref[...]                                          # (4, Cout)

        # ---- conv1 -> bn1 -> relu (conv bias cancels exactly under BN)
        h = batchnorm(conv_banded(xp_ref, w1_ref), bnp[0:1, :], bnp[1:2, :])
        h = jnp.maximum(h, 0.0)

        # ---- stage h with a 1-row vertical halo; zero only the halo rows
        mid_ref[:, 0:1, :] = jnp.zeros((n_img, 1, WCout), jnp.float32)
        mid_ref[:, H + 1:H + 2, :] = jnp.zeros((n_img, 1, WCout), jnp.float32)
        mid_ref[:, 1:1 + H, :] = h.reshape(n_img, H, WCout)

        # ---- conv2 -> bn2
        y2 = batchnorm(conv_banded(mid_ref, w2_ref), bnp[2:3, :], bnp[3:4, :])

        # ---- shortcut + residual add + relu, one fused sweep, lane-dense store
        x_rows = xp_ref[:, 1:1 + H, :].reshape(NH, w_cin)
        if has_proj:
            sc = jnp.dot(x_rows.astype(jnp.bfloat16), ws_ref[...],
                         preferred_element_type=jnp.float32) + bst_ref[...]
        else:
            sc = x_rows                                            # identity
        o_ref[...] = jnp.maximum(y2 + sc, 0.0)

    return kernel


# ----------------------------------------------------------------------------- wrapper
@jax.jit
def residual_block_pallas(x_nchw, kparams):
    """x_nchw: (N, Cin, H, W) f32 -> (N, Cout, H, W) f32."""
    N, Cin, H, W = x_nchw.shape
    Cout = kparams["bn"].shape[-1]
    has_proj = "ws_band" in kparams

    # NHWC, fold W into the lane axis, add the 1-row vertical halo only.
    x = jnp.transpose(x_nchw, (0, 2, 3, 1)).astype(jnp.float32)
    xp = jnp.pad(x.reshape(N, H, W * Cin), ((0, 0), (1, 1), (0, 0)))

    args = [xp, kparams["w1_band"], kparams["w2_band"]]
    if has_proj:
        args += [kparams["ws_band"], kparams["bn"], kparams["bs_tiled"]]
    else:
        args += [kparams["bn"]]

    vmem = pl.BlockSpec(memory_space=pltpu.MemorySpace.VMEM)
    out2d = pl.pallas_call(
        _make_resblock_kernel(has_proj),
        out_shape=jax.ShapeDtypeStruct((N * H, W * Cout), jnp.float32),
        in_specs=[vmem] * len(args),
        out_specs=vmem,
        scratch_shapes=[pltpu.VMEM((N, H + 2, W * Cout), jnp.float32)],
        compiler_params=pltpu.CompilerParams(
            vmem_limit_bytes=32 * 1024 * 1024),   # whole working set << 1 MiB
    )(*args)

    out = out2d.reshape(N, H, W, Cout)
    return jnp.transpose(out, (0, 3, 1, 2))                        # back to NCHW


# ----------------------------------------------------------------------------- weight prep
def _band_from_conv3x3(w, W):
    """(3, 3, Cin, Cout) taps -> (3, W*Cin, W*Cout) block-banded weights.

    band[ky][wi*Cin+ci, wo*Cout+co] = w[ky, wi-wo+1, ci, co] for |wi-wo| <= 1;
    the band edges encode the horizontal 'same' padding.
    """
    w = np.asarray(w, np.float32)
    _, _, cin, cout = w.shape
    band = np.zeros((3, W * cin, W * cout), np.float32)
    for ky in range(3):
        for kx in range(3):
            for wo in range(W):
                wi = wo + kx - 1
                if 0 <= wi < W:
                    band[ky, wi * cin:(wi + 1) * cin,
                         wo * cout:(wo + 1) * cout] = w[ky, kx]
    return jnp.asarray(band, jnp.bfloat16)


def _blockdiag_1x1(ws, W):
    """(Cin, Cout) 1x1 conv -> (W*Cin, W*Cout) block-diagonal weight."""
    ws = np.asarray(ws, np.float32)
    cin, cout = ws.shape
    blk = np.zeros((W * cin, W * cout), np.float32)
    for wo in range(W):
        blk[wo * cin:(wo + 1) * cin, wo * cout:(wo + 1) * cout] = ws
    return jnp.asarray(blk, jnp.bfloat16)


def prepare_kernel_params(params, W):
    """One-time host-side weight prep (banding, packing, bf16 cast).

    NOTE: conv biases b1/b2 are dropped on purpose -- a per-channel constant
    added before train-mode BatchNorm is removed exactly by the mean
    subtraction, so it has no effect on the forward output.
    """
    cout = params["w1"].shape[-1]
    kp = {
        "w1_band": _band_from_conv3x3(params["w1"], W),
        "w2_band": _band_from_conv3x3(params["w2"], W),
        "bn": jnp.stack([params["g1"], params["be1"],
                         params["g2"], params["be2"]]).astype(jnp.float32),
    }
    if "ws" in params:                       # projection shortcut (Cin != Cout)
        kp["ws_band"] = _blockdiag_1x1(params["ws"], W)
        kp["bs_tiled"] = jnp.tile(params["bs"].reshape(1, cout),
                                  (1, W)).astype(jnp.float32)
    return kp


# ----------------------------------------------------------------------------- params & reference
def make_params(key, in_channels, out_channels):
    """Deterministic init matching nn.Conv2d / nn.BatchNorm2d defaults."""
    k1, k2, k3 = jax.random.split(key, 3)

    def conv_init(k, kh, kw, cin, cout):
        bound = 1.0 / np.sqrt(cin * kh * kw)
        kw_, kb_ = jax.random.split(k)
        w = jax.random.uniform(kw_, (kh, kw, cin, cout), jnp.float32, -bound, bound)
        b = jax.random.uniform(kb_, (cout,), jnp.float32, -bound, bound)
        return w, b

    w1, b1 = conv_init(k1, 3, 3, in_channels, out_channels)
    w2, b2 = conv_init(k2, 3, 3, out_channels, out_channels)
    params = {
        "w1": w1, "b1": b1,
        "g1": jnp.ones((out_channels,), jnp.float32),
        "be1": jnp.zeros((out_channels,), jnp.float32),
        "w2": w2, "b2": b2,
        "g2": jnp.ones((out_channels,), jnp.float32),
        "be2": jnp.zeros((out_channels,), jnp.float32),
    }
    if in_channels != out_channels:
        ws4, bs = conv_init(k3, 1, 1, in_channels, out_channels)
        params["ws"] = ws4.reshape(in_channels, out_channels)
        params["bs"] = bs
    return params


def residual_block_ref(x_nchw, params, matmul_dtype=jnp.float32):
    """Plain-JAX reference of the PyTorch forward (train-mode BN).

    matmul_dtype=bf16 reproduces the kernel's MXU input precision (f32 accum).
    """
    x = jnp.transpose(x_nchw, (0, 2, 3, 1)).astype(jnp.float32)

    def conv3x3(inp, w, b):
        y = jax.lax.conv_general_dilated(
            inp.astype(matmul_dtype), w.astype(matmul_dtype), (1, 1), "SAME",
            dimension_numbers=("NHWC", "HWIO", "NHWC"),
            preferred_element_type=jnp.float32,
            precision=jax.lax.Precision.HIGHEST)
        return y + b.reshape(1, 1, 1, -1)

    def bn(y, g, be):
        mu = jnp.mean(y, axis=(0, 1, 2), keepdims=True)
        var = jnp.mean((y - mu) ** 2, axis=(0, 1, 2), keepdims=True)
        return ((y - mu) * jax.lax.rsqrt(var + 1e-5) * g.reshape(1, 1, 1, -1)
                + be.reshape(1, 1, 1, -1))

    h = jax.nn.relu(bn(conv3x3(x, params["w1"], params["b1"]),
                       params["g1"], params["be1"]))
    y2 = bn(conv3x3(h, params["w2"], params["b2"]),
            params["g2"], params["be2"])
    if "ws" in params:
        sc = jnp.einsum("nhwc,cd->nhwd", x.astype(matmul_dtype),
                        params["ws"].astype(matmul_dtype),
                        preferred_element_type=jnp.float32,
                        precision=jax.lax.Precision.HIGHEST)
        sc = sc + params["bs"].reshape(1, 1, 1, -1)
    else:
        sc = x
    out = jax.nn.relu(y2 + sc)
    return jnp.transpose(out, (0, 3, 1, 2))


# ----------------------------------------------------------------------------- main
if __name__ == "__main__":
    key = jax.random.PRNGKey(0)
    kx, kp_key = jax.random.split(key)

    N, Cin, Cout, H, W = 2, 4, 8, 16, 16
    x = jax.random.normal(kx, (N, Cin, H, W), jnp.float32)
    params = make_params(kp_key, Cin, Cout)
    kparams = prepare_kernel_params(params, W)

    out = residual_block_pallas(x, kparams)
    out = jax.block_until_ready(out)
    assert out.shape == (N, Cout, H, W), out.shape

    # Matched-precision reference (bf16 MXU operands, f32 accumulation).
    ref_bf16 = residual_block_ref(x, params, matmul_dtype=jnp.bfloat16)
    assert jnp.allclose(out, ref_bf16, atol=1e-2, rtol=1e-2), (
        float(jnp.max(jnp.abs(out - ref_bf16))))

    # Full-f32 reference: loose sanity bound (covers the bf16 operand cast).
    ref_f32 = residual_block_ref(x, params, matmul_dtype=jnp.float32)
    assert float(jnp.max(jnp.abs(out - ref_f32))) < 0.1

    print("KERNEL_OK")
</pallas_src>

<mosaic_0001>
module attributes {stable_mosaic.version = 11 : i64} {
  func.func @kernel(%arg0: memref<2x18x64xf32, #tpu.memory_space<vmem>>, %arg1: memref<3x64x128xbf16, #tpu.memory_space<vmem>>, %arg2: memref<3x128x128xbf16, #tpu.memory_space<vmem>>, %arg3: memref<64x128xbf16, #tpu.memory_space<vmem>>, %arg4: memref<4x8xf32, #tpu.memory_space<vmem>>, %arg5: memref<1x128xf32, #tpu.memory_space<vmem>>, %arg6: memref<32x128xf32, #tpu.memory_space<vmem>>, %arg7: memref<2x18x128xf32, #tpu.memory_space<vmem>>) attributes {dimension_semantics = [], scalar_prefetch = 0 : i64, scratch_operands = 1 : i64, tpu.core_type = #tpu.core_type<tc>} {
    %0 = tpu.iota {dimensions = array<i32: 0>} : vector<128x8xi32>
    %1 = tpu.iota {dimensions = array<i32: 1>} : vector<128x8xi32>
    %c8_i32 = arith.constant 8 : i32
    %c0_i32 = arith.constant 0 : i32
    %2 = arith.cmpi eq, %c8_i32, %c0_i32 : i32
    %c1_i32 = arith.constant 1 : i32
    %3 = arith.select %2, %c1_i32, %c8_i32 : i32
    %4 = vector.broadcast %3 : i32 to vector<128x8xi32>
    %5 = arith.remsi %0, %4 : vector<128x8xi32>
    %c0_i32_0 = arith.constant 0 : i32
    %6 = vector.broadcast %c0_i32_0 : i32 to vector<128x8xi32>
    %7 = arith.cmpi ne, %5, %6 : vector<128x8xi32>
    %c0_i32_1 = arith.constant 0 : i32
    %8 = vector.broadcast %c0_i32_1 : i32 to vector<128x8xi32>
    %9 = arith.cmpi slt, %5, %8 : vector<128x8xi32>
    %c0_i32_2 = arith.constant 0 : i32
    %10 = arith.cmpi slt, %3, %c0_i32_2 : i32
    %11 = vector.broadcast %10 : i1 to vector<128x8xi1>
    %12 = vector.broadcast %11 : vector<128x8xi1> to vector<128x8xi1>
    %13 = arith.xori %9, %12 : vector<128x8xi1>
    %14 = arith.andi %13, %7 : vector<128x8xi1>
    %15 = vector.broadcast %3 : i32 to vector<128x8xi32>
    %16 = arith.addi %5, %15 : vector<128x8xi32>
    %17 = arith.select %14, %16, %5 : vector<128x8xi1>, vector<128x8xi32>
    %18 = arith.cmpi eq, %17, %1 : vector<128x8xi32>
    %19 = arith.extui %18 : vector<128x8xi1> to vector<128x8xi32>
    %20 = arith.sitofp %19 : vector<128x8xi32> to vector<128x8xf32>
    %21 = tpu.iota {dimensions = array<i32: 1>} : vector<8x128xi32>
    %22 = tpu.iota {dimensions = array<i32: 0>} : vector<8x128xi32>
    %c8_i32_3 = arith.constant 8 : i32
    %c0_i32_4 = arith.constant 0 : i32
    %23 = arith.cmpi eq, %c8_i32_3, %c0_i32_4 : i32
    %c1_i32_5 = arith.constant 1 : i32
    %24 = arith.select %23, %c1_i32_5, %c8_i32_3 : i32
    %25 = vector.broadcast %24 : i32 to vector<8x128xi32>
    %26 = arith.remsi %21, %25 : vector<8x128xi32>
    %c0_i32_6 = arith.constant 0 : i32
    %27 = vector.broadcast %c0_i32_6 : i32 to vector<8x128xi32>
    %28 = arith.cmpi ne, %26, %27 : vector<8x128xi32>
    %c0_i32_7 = arith.constant 0 : i32
    %29 = vector.broadcast %c0_i32_7 : i32 to vector<8x128xi32>
    %30 = arith.cmpi slt, %26, %29 : vector<8x128xi32>
    %c0_i32_8 = arith.constant 0 : i32
    %31 = arith.cmpi slt, %24, %c0_i32_8 : i32
    %32 = vector.broadcast %31 : i1 to vector<8x128xi1>
    %33 = vector.broadcast %32 : vector<8x128xi1> to vector<8x128xi1>
    %34 = arith.xori %30, %33 : vector<8x128xi1>
    %35 = arith.andi %34, %28 : vector<8x128xi1>
    %36 = vector.broadcast %24 : i32 to vector<8x128xi32>
    %37 = arith.addi %26, %36 : vector<8x128xi32>
    %38 = arith.select %35, %37, %26 : vector<8x128xi1>, vector<8x128xi32>
    %39 = arith.cmpi eq, %38, %22 : vector<8x128xi32>
    %40 = arith.extui %39 : vector<8x128xi1> to vector<8x128xi32>
    %41 = arith.sitofp %40 : vector<8x128xi32> to vector<8x128xf32>
    %c0 = arith.constant 0 : index
    %c0_9 = arith.constant 0 : index
    %42 = vector.load %arg4[%c0, %c0_9] : memref<4x8xf32, #tpu.memory_space<vmem>>, vector<4x8xf32>
    %cst = arith.constant 0.000000e+00 : f32
    %43 = vector.broadcast %cst : f32 to vector<32x128xf32>
    %c0_10 = arith.constant 0 : index
    %c0_11 = arith.constant 0 : index
    %c0_12 = arith.constant 0 : index
    %44 = vector.load %arg0[%c0_10, %c0_11, %c0_12] : memref<2x18x64xf32, #tpu.memory_space<vmem>>, vector<2x16x64xf32>
    %45 = vector.shape_cast %44 : vector<2x16x64xf32> to vector<32x64xf32>
    %46 = arith.truncf %45 : vector<32x64xf32> to vector<32x64xbf16>
    %c0_13 = arith.constant 0 : index
    %c0_14 = arith.constant 0 : index
    %c0_15 = arith.constant 0 : index
    %47 = vector.load %arg1[%c0_13, %c0_14, %c0_15] : memref<3x64x128xbf16, #tpu.memory_space<vmem>>, vector<1x64x128xbf16>
    %48 = vector.shape_cast %47 : vector<1x64x128xbf16> to vector<64x128xbf16>
    %cst_16 = arith.constant dense<0.000000e+00> : vector<32x128xf32>
    %49 = tpu.matmul %46, %48, %cst_16 {dimension_numbers = #tpu.dot_dimension_numbers<[1], [0], [0], [1], [0, 0, 1, 1], [], []>} : vector<32x64xbf16>, vector<64x128xbf16>, vector<32x128xf32> -> vector<32x128xf32>
    %50 = arith.addf %43, %49 : vector<32x128xf32>
    %c0_17 = arith.constant 0 : index
    %c1 = arith.constant 1 : index
    %c0_18 = arith.constant 0 : index
    %51 = vector.load %arg0[%c0_17, %c1, %c0_18] : memref<2x18x64xf32, #tpu.memory_space<vmem>>, vector<2x16x64xf32>
    %52 = vector.shape_cast %51 : vector<2x16x64xf32> to vector<32x64xf32>
    %53 = arith.truncf %52 : vector<32x64xf32> to vector<32x64xbf16>
    %c1_19 = arith.constant 1 : index
    %c0_20 = arith.constant 0 : index
    %c0_21 = arith.constant 0 : index
    %54 = vector.load %arg1[%c1_19, %c0_20, %c0_21] : memref<3x64x128xbf16, #tpu.memory_space<vmem>>, vector<1x64x128xbf16>
    %55 = vector.shape_cast %54 : vector<1x64x128xbf16> to vector<64x128xbf16>
    %cst_22 = arith.constant dense<0.000000e+00> : vector<32x128xf32>
    %56 = tpu.matmul %53, %55, %cst_22 {dimension_numbers = #tpu.dot_dimension_numbers<[1], [0], [0], [1], [0, 0, 1, 1], [], []>} : vector<32x64xbf16>, vector<64x128xbf16>, vector<32x128xf32> -> vector<32x128xf32>
    %57 = arith.addf %50, %56 : vector<32x128xf32>
    %c0_23 = arith.constant 0 : index
    %c2 = arith.constant 2 : index
    %c0_24 = arith.constant 0 : index
    %58 = vector.load %arg0[%c0_23, %c2, %c0_24] : memref<2x18x64xf32, #tpu.memory_space<vmem>>, vector<2x16x64xf32>
    %59 = vector.shape_cast %58 : vector<2x16x64xf32> to vector<32x64xf32>
    %60 = arith.truncf %59 : vector<32x64xf32> to vector<32x64xbf16>
    %c2_25 = arith.constant 2 : index
    %c0_26 = arith.constant 0 : index
    %c0_27 = arith.constant 0 : index
    %61 = vector.load %arg1[%c2_25, %c0_26, %c0_27] : memref<3x64x128xbf16, #tpu.memory_space<vmem>>, vector<1x64x128xbf16>
    %62 = vector.shape_cast %61 : vector<1x64x128xbf16> to vector<64x128xbf16>
    %cst_28 = arith.constant dense<0.000000e+00> : vector<32x128xf32>
    %63 = tpu.matmul %60, %62, %cst_28 {dimension_numbers = #tpu.dot_dimension_numbers<[1], [0], [0], [1], [0, 0, 1, 1], [], []>} : vector<32x64xbf16>, vector<64x128xbf16>, vector<32x128xf32> -> vector<32x128xf32>
    %64 = arith.addf %57, %63 : vector<32x128xf32>
    %65 = vector.extract_strided_slice %42 {offsets = [0, 0], sizes = [1, 8], strides = [1, 1]} : vector<4x8xf32> to vector<1x8xf32>
    %66 = vector.extract_strided_slice %42 {offsets = [1, 0], sizes = [1, 8], strides = [1, 1]} : vector<4x8xf32> to vector<1x8xf32>
    %cst_29 = arith.constant dense<0.000000e+00> : vector<128xf32>
    %67 = vector.multi_reduction <add>, %64, %cst_29 [0] : vector<32x128xf32> to vector<128xf32>
    %68 = vector.shape_cast %67 : vector<128xf32> to vector<1x128xf32>
    %69 = arith.mulf %64, %64 : vector<32x128xf32>
    %cst_30 = arith.constant dense<0.000000e+00> : vector<128xf32>
    %70 = vector.multi_reduction <add>, %69, %cst_30 [0] : vector<32x128xf32> to vector<128xf32>
    %71 = vector.shape_cast %70 : vector<128xf32> to vector<1x128xf32>
    %cst_31 = arith.constant dense<0.000000e+00> : vector<1x8xf32>
    %72 = tpu.matmul %68, %20, %cst_31 {dimension_numbers = #tpu.dot_dimension_numbers<[1], [0], [0], [1], [0, 0, 1, 1], [], []>} : vector<1x128xf32>, vector<128x8xf32>, vector<1x8xf32> -> vector<1x8xf32>
    %cst_32 = arith.constant dense<0.000000e+00> : vector<1x8xf32>
    %73 = tpu.matmul %71, %20, %cst_32 {dimension_numbers = #tpu.dot_dimension_numbers<[1], [0], [0], [1], [0, 0, 1, 1], [], []>} : vector<1x128xf32>, vector<128x8xf32>, vector<1x8xf32> -> vector<1x8xf32>
    %cst_33 = arith.constant 5.120000e+02 : f32
    %74 = vector.broadcast %cst_33 : f32 to vector<1x8xf32>
    %75 = arith.divf %72, %74 : vector<1x8xf32>
    %cst_34 = arith.constant 5.120000e+02 : f32
    %76 = vector.broadcast %cst_34 : f32 to vector<1x8xf32>
    %77 = arith.divf %73, %76 : vector<1x8xf32>
    %78 = arith.mulf %75, %75 : vector<1x8xf32>
    %79 = arith.subf %77, %78 : vector<1x8xf32>
    %cst_35 = arith.constant 9.99999974E-6 : f32
    %80 = vector.broadcast %cst_35 : f32 to vector<1x8xf32>
    %81 = arith.addf %79, %80 : vector<1x8xf32>
    %82 = math.rsqrt %81 : vector<1x8xf32>
    %83 = arith.mulf %65, %82 : vector<1x8xf32>
    %84 = arith.mulf %75, %83 : vector<1x8xf32>
    %85 = arith.subf %66, %84 : vector<1x8xf32>
    %cst_36 = arith.constant dense<0.000000e+00> : vector<1x128xf32>
    %86 = tpu.matmul %83, %41, %cst_36 {dimension_numbers = #tpu.dot_dimension_numbers<[1], [0], [0], [1], [0, 0, 1, 1], [], []>} : vector<1x8xf32>, vector<8x128xf32>, vector<1x128xf32> -> vector<1x128xf32>
    %cst_37 = arith.constant dense<0.000000e+00> : vector<1x128xf32>
    %87 = tpu.matmul %85, %41, %cst_37 {dimension_numbers = #tpu.dot_dimension_numbers<[1], [0], [0], [1], [0, 0, 1, 1], [], []>} : vector<1x8xf32>, vector<8x128xf32>, vector<1x128xf32> -> vector<1x128xf32>
    %88 = vector.broadcast %86 : vector<1x128xf32> to vector<32x128xf32>
    %89 = arith.mulf %64, %88 : vector<32x128xf32>
    %90 = vector.broadcast %87 : vector<1x128xf32> to vector<32x128xf32>
    %91 = arith.addf %89, %90 : vector<32x128xf32>
    %cst_38 = arith.constant 0.000000e+00 : f32
    %92 = vector.broadcast %cst_38 : f32 to vector<32x128xf32>
    %93 = arith.maximumf %91, %92 : vector<32x128xf32>
    %cst_39 = arith.constant 0.000000e+00 : f32
    %94 = vector.broadcast %cst_39 : f32 to vector<2x1x128xf32>
    %c0_40 = arith.constant 0 : index
    %c0_41 = arith.constant 0 : index
    %c0_42 = arith.constant 0 : index
    %95 = vector.load %arg7[%c0_40, %c0_41, %c0_42] : memref<2x18x128xf32, #tpu.memory_space<vmem>>, vector<2x1x128xf32>
    tpu.vector_store %arg7[%c0_40, %c0_41, %c0_42], %94 {strides = array<i32>} : memref<2x18x128xf32, #tpu.memory_space<vmem>>, vector<2x1x128xf32>,
    %cst_43 = arith.constant 0.000000e+00 : f32
    %96 = vector.broadcast %cst_43 : f32 to vector<2x1x128xf32>
    %c0_44 = arith.constant 0 : index
    %c17 = arith.constant 17 : index
    %c0_45 = arith.constant 0 : index
    %97 = vector.load %arg7[%c0_44, %c17, %c0_45] : memref<2x18x128xf32, #tpu.memory_space<vmem>>, vector<2x1x128xf32>
    tpu.vector_store %arg7[%c0_44, %c17, %c0_45], %96 {strides = array<i32>} : memref<2x18x128xf32, #tpu.memory_space<vmem>>, vector<2x1x128xf32>,
    %98 = vector.shape_cast %93 : vector<32x128xf32> to vector<2x16x128xf32>
    %c0_46 = arith.constant 0 : index
    %c1_47 = arith.constant 1 : index
    %c0_48 = arith.constant 0 : index
    %99 = vector.load %arg7[%c0_46, %c1_47, %c0_48] : memref<2x18x128xf32, #tpu.memory_space<vmem>>, vector<2x16x128xf32>
    tpu.vector_store %arg7[%c0_46, %c1_47, %c0_48], %98 {strides = array<i32>} : memref<2x18x128xf32, #tpu.memory_space<vmem>>, vector<2x16x128xf32>,
    %cst_49 = arith.constant 0.000000e+00 : f32
    %100 = vector.broadcast %cst_49 : f32 to vector<32x128xf32>
    %c0_50 = arith.constant 0 : index
    %c0_51 = arith.constant 0 : index
    %c0_52 = arith.constant 0 : index
    %101 = vector.load %arg7[%c0_50, %c0_51, %c0_52] : memref<2x18x128xf32, #tpu.memory_space<vmem>>, vector<2x16x128xf32>
    %102 = vector.shape_cast %101 : vector<2x16x128xf32> to vector<32x128xf32>
    %103 = arith.truncf %102 : vector<32x128xf32> to vector<32x128xbf16>
    %c0_53 = arith.constant 0 : index
    %c0_54 = arith.constant 0 : index
    %c0_55 = arith.constant 0 : index
    %104 = vector.load %arg2[%c0_53, %c0_54, %c0_55] : memref<3x128x128xbf16, #tpu.memory_space<vmem>>, vector<1x128x128xbf16>
    %105 = vector.shape_cast %104 : vector<1x128x128xbf16> to vector<128x128xbf16>
    %cst_56 = arith.constant dense<0.000000e+00> : vector<32x128xf32>
    %106 = tpu.matmul %103, %105, %cst_56 {dimension_numbers = #tpu.dot_dimension_numbers<[1], [0], [0], [1], [0, 0, 1, 1], [], []>} : vector<32x128xbf16>, vector<128x128xbf16>, vector<32x128xf32> -> vector<32x128xf32>
    %107 = arith.addf %100, %106 : vector<32x128xf32>
    %c0_57 = arith.constant 0 : index
    %c1_58 = arith.constant 1 : index
    %c0_59 = arith.constant 0 : index
    %108 = vector.load %arg7[%c0_57, %c1_58, %c0_59] : memref<2x18x128xf32, #tpu.memory_space<vmem>>, vector<2x16x128xf32>
    %109 = vector.shape_cast %108 : vector<2x16x128xf32> to vector<32x128xf32>
    %110 = arith.truncf %109 : vector<32x128xf32> to vector<32x128xbf16>
    %c1_60 = arith.constant 1 : index
    %c0_61 = arith.constant 0 : index
    %c0_62 = arith.constant 0 : index
    %111 = vector.load %arg2[%c1_60, %c0_61, %c0_62] : memref<3x128x128xbf16, #tpu.memory_space<vmem>>, vector<1x128x128xbf16>
    %112 = vector.shape_cast %111 : vector<1x128x128xbf16> to vector<128x128xbf16>
    %cst_63 = arith.constant dense<0.000000e+00> : vector<32x128xf32>
    %113 = tpu.matmul %110, %112, %cst_63 {dimension_numbers = #tpu.dot_dimension_numbers<[1], [0], [0], [1], [0, 0, 1, 1], [], []>} : vector<32x128xbf16>, vector<128x128xbf16>, vector<32x128xf32> -> vector<32x128xf32>
    %114 = arith.addf %107, %113 : vector<32x128xf32>
    %c0_64 = arith.constant 0 : index
    %c2_65 = arith.constant 2 : index
    %c0_66 = arith.constant 0 : index
    %115 = vector.load %arg7[%c0_64, %c2_65, %c0_66] : memref<2x18x128xf32, #tpu.memory_space<vmem>>, vector<2x16x128xf32>
    %116 = vector.shape_cast %115 : vector<2x16x128xf32> to vector<32x128xf32>
    %117 = arith.truncf %116 : vector<32x128xf32> to vector<32x128xbf16>
    %c2_67 = arith.constant 2 : index
    %c0_68 = arith.constant 0 : index
    %c0_69 = arith.constant 0 : index
    %118 = vector.load %arg2[%c2_67, %c0_68, %c0_69] : memref<3x128x128xbf16, #tpu.memory_space<vmem>>, vector<1x128x128xbf16>
    %119 = vector.shape_cast %118 : vector<1x128x128xbf16> to vector<128x128xbf16>
    %cst_70 = arith.constant dense<0.000000e+00> : vector<32x128xf32>
    %120 = tpu.matmul %117, %119, %cst_70 {dimension_numbers = #tpu.dot_dimension_numbers<[1], [0], [0], [1], [0, 0, 1, 1], [], []>} : vector<32x128xbf16>, vector<128x128xbf16>, vector<32x128xf32> -> vector<32x128xf32>
    %121 = arith.addf %114, %120 : vector<32x128xf32>
    %122 = vector.extract_strided_slice %42 {offsets = [2, 0], sizes = [1, 8], strides = [1, 1]} : vector<4x8xf32> to vector<1x8xf32>
    %123 = vector.extract_strided_slice %42 {offsets = [3, 0], sizes = [1, 8], strides = [1, 1]} : vector<4x8xf32> to vector<1x8xf32>
    %cst_71 = arith.constant dense<0.000000e+00> : vector<128xf32>
    %124 = vector.multi_reduction <add>, %121, %cst_71 [0] : vector<32x128xf32> to vector<128xf32>
    %125 = vector.shape_cast %124 : vector<128xf32> to vector<1x128xf32>
    %126 = arith.mulf %121, %121 : vector<32x128xf32>
    %cst_72 = arith.constant dense<0.000000e+00> : vector<128xf32>
    %127 = vector.multi_reduction <add>, %126, %cst_72 [0] : vector<32x128xf32> to vector<128xf32>
    %128 = vector.shape_cast %127 : vector<128xf32> to vector<1x128xf32>
    %cst_73 = arith.constant dense<0.000000e+00> : vector<1x8xf32>
    %129 = tpu.matmul %125, %20, %cst_73 {dimension_numbers = #tpu.dot_dimension_numbers<[1], [0], [0], [1], [0, 0, 1, 1], [], []>} : vector<1x128xf32>, vector<128x8xf32>, vector<1x8xf32> -> vector<1x8xf32>
    %cst_74 = arith.constant dense<0.000000e+00> : vector<1x8xf32>
    %130 = tpu.matmul %128, %20, %cst_74 {dimension_numbers = #tpu.dot_dimension_numbers<[1], [0], [0], [1], [0, 0, 1, 1], [], []>} : vector<1x128xf32>, vector<128x8xf32>, vector<1x8xf32> -> vector<1x8xf32>
    %cst_75 = arith.constant 5.120000e+02 : f32
    %131 = vector.broadcast %cst_75 : f32 to vector<1x8xf32>
    %132 = arith.divf %129, %131 : vector<1x8xf32>
    %cst_76 = arith.constant 5.120000e+02 : f32
    %133 = vector.broadcast %cst_76 : f32 to vector<1x8xf32>
    %134 = arith.divf %130, %133 : vector<1x8xf32>
    %135 = arith.mulf %132, %132 : vector<1x8xf32>
    %136 = arith.subf %134, %135 : vector<1x8xf32>
    %cst_77 = arith.constant 9.99999974E-6 : f32
    %137 = vector.broadcast %cst_77 : f32 to vector<1x8xf32>
    %138 = arith.addf %136, %137 : vector<1x8xf32>
    %139 = math.rsqrt %138 : vector<1x8xf32>
    %140 = arith.mulf %122, %139 : vector<1x8xf32>
    %141 = arith.mulf %132, %140 : vector<1x8xf32>
    %142 = arith.subf %123, %141 : vector<1x8xf32>
    %cst_78 = arith.constant dense<0.000000e+00> : vector<1x128xf32>
    %143 = tpu.matmul %140, %41, %cst_78 {dimension_numbers = #tpu.dot_dimension_numbers<[1], [0], [0], [1], [0, 0, 1, 1], [], []>} : vector<1x8xf32>, vector<8x128xf32>, vector<1x128xf32> -> vector<1x128xf32>
    %cst_79 = arith.constant dense<0.000000e+00> : vector<1x128xf32>
    %144 = tpu.matmul %142, %41, %cst_79 {dimension_numbers = #tpu.dot_dimension_numbers<[1], [0], [0], [1], [0, 0, 1, 1], [], []>} : vector<1x8xf32>, vector<8x128xf32>, vector<1x128xf32> -> vector<1x128xf32>
    %145 = vector.broadcast %143 : vector<1x128xf32> to vector<32x128xf32>
    %146 = arith.mulf %121, %145 : vector<32x128xf32>
    %147 = vector.broadcast %144 : vector<1x128xf32> to vector<32x128xf32>
    %148 = arith.addf %146, %147 : vector<32x128xf32>
    %c0_80 = arith.constant 0 : index
    %c1_81 = arith.constant 1 : index
    %c0_82 = arith.constant 0 : index
    %149 = vector.load %arg0[%c0_80, %c1_81, %c0_82] : memref<2x18x64xf32, #tpu.memory_space<vmem>>, vector<2x16x64xf32>
    %150 = vector.shape_cast %149 : vector<2x16x64xf32> to vector<32x64xf32>
    %151 = arith.truncf %150 : vector<32x64xf32> to vector<32x64xbf16>
    %c0_83 = arith.constant 0 : index
    %c0_84 = arith.constant 0 : index
    %152 = vector.load %arg3[%c0_83, %c0_84] : memref<64x128xbf16, #tpu.memory_space<vmem>>, vector<64x128xbf16>
    %cst_85 = arith.constant dense<0.000000e+00> : vector<32x128xf32>
    %153 = tpu.matmul %151, %152, %cst_85 {dimension_numbers = #tpu.dot_dimension_numbers<[1], [0], [0], [1], [0, 0, 1, 1], [], []>} : vector<32x64xbf16>, vector<64x128xbf16>, vector<32x128xf32> -> vector<32x128xf32>
    %c0_86 = arith.constant 0 : index
    %c0_87 = arith.constant 0 : index
    %154 = vector.load %arg5[%c0_86, %c0_87] : memref<1x128xf32, #tpu.memory_space<vmem>>, vector<1x128xf32>
    %155 = vector.broadcast %154 : vector<1x128xf32> to vector<32x128xf32>
    %156 = arith.addf %153, %155 : vector<32x128xf32>
    %157 = arith.addf %148, %156 : vector<32x128xf32>
    %cst_88 = arith.constant 0.000000e+00 : f32
    %158 = vector.broadcast %cst_88 : f32 to vector<32x128xf32>
    %159 = arith.maximumf %157, %158 : vector<32x128xf32>
    %c0_89 = arith.constant 0 : index
    %c0_90 = arith.constant 0 : index
    %160 = vector.load %arg6[%c0_89, %c0_90] : memref<32x128xf32, #tpu.memory_space<vmem>>, vector<32x128xf32>
    tpu.vector_store %arg6[%c0_89, %c0_90], %159 {strides = array<i32>} : memref<32x128xf32, #tpu.memory_space<vmem>>, vector<32x128xf32>,
    return
  }
}

</mosaic_0001>

<llo_original>
// kernel: residual_block_pallas.1
$region0: #{residual_block_pallas.1}
  #allocation0 [shape = 'u32[]', space=smem, size = 0x4, offset = 0x4, fixed_abs, tag = 'smem constant byte address 0x4 - core index']
  #allocation1 [shape = 'u32[144,128]{1,0:T(1,128)}', space=vmem, size = 0x12000, scoped, tag = 'internal scratch']
  #allocation2 [shape = 'f32[2,18,128]{2,1,0:T(8,128)}', space=vmem, size = 0x6000, scoped, tag = 'scratch operand']
  %s0 = inlined_call_operand.vmem [shape: f32[2,18,64], index: 0, kind: input, shape index: {}]
  %s1 = inlined_call_operand.vmem [shape: bf16[3,64,128], index: 1, kind: input, shape index: {}]
  %s2 = inlined_call_operand.vmem [shape: bf16[3,128,128], index: 2, kind: input, shape index: {}]
  %s3 = inlined_call_operand.vmem [shape: bf16[64,128], index: 3, kind: input, shape index: {}]
  %s4 = inlined_call_operand.vmem [shape: f32[4,8], index: 4, kind: input, shape index: {}]
  %s5 = inlined_call_operand.vmem [shape: f32[1,128], index: 5, kind: input, shape index: {}]
  %s6 = inlined_call_operand.vmem [shape: f32[32,128], index: 6, kind: output, shape index: {}]
  %s7 = sld [smem:[#allocation0]]
  $region34: #{residual_block_pallas.1} parent=0
    _
  %s9 = ssub.s32 1, %s7
  %s10 = scalar_select 0, %s9, %s7
  // Predicated region
  $region2: #{residual_block_pallas.1} parent=0 // pred_check
    _
  $region3: #{residual_block_pallas.1} parent=0 // pred_check_branch
    %12 = sbr.rel (0) target = $region5
  $region4: #{residual_block_pallas.1} parent=0 // pred_region
    _
  $region5: #{residual_block_pallas.1} parent=0 // pred_fallthru
    _
  // Predicated region
  $region6: #{residual_block_pallas.1} parent=0 // pred_check
    _
  $region7: #{residual_block_pallas.1} parent=0 // pred_check_branch
    %14 = sbr.rel (0) target = $region9
  $region8: #{residual_block_pallas.1} parent=0 // pred_region
    _
  $region9: #{residual_block_pallas.1} parent=0 // pred_fallthru
    _
  // Predicated region
  $region10: #{residual_block_pallas.1} parent=0 // pred_check
    _
  $region11: #{residual_block_pallas.1} parent=0 // pred_check_branch
    %16 = sbr.rel (0) target = $region13
  $region12: #{residual_block_pallas.1} parent=0 // pred_region
    _
  $region13: #{residual_block_pallas.1} parent=0 // pred_fallthru
    _
  // Predicated region
  $region14: #{residual_block_pallas.1} parent=0 // pred_check
    _
  $region15: #{residual_block_pallas.1} parent=0 // pred_check_branch
    %18 = sbr.rel (0) target = $region17
  $region16: #{residual_block_pallas.1} parent=0 // pred_region
    _
  $region17: #{residual_block_pallas.1} parent=0 // pred_fallthru
    _
  // Predicated region
  $region18: #{residual_block_pallas.1} parent=0 // pred_check
    _
  $region19: #{residual_block_pallas.1} parent=0 // pred_check_branch
    %20 = sbr.rel (0) target = $region21
  $region20: #{residual_block_pallas.1} parent=0 // pred_region
    _
  $region21: #{residual_block_pallas.1} parent=0 // pred_fallthru
    _
  // Predicated region
  $region22: #{residual_block_pallas.1} parent=0 // pred_check
    _
  $region23: #{residual_block_pallas.1} parent=0 // pred_check_branch
    %22 = sbr.rel (0) target = $region25
  $region24: #{residual_block_pallas.1} parent=0 // pred_region
    _
  $region25: #{residual_block_pallas.1} parent=0 // pred_fallthru
    _
  %v24 = vlaneseq
  %v25 = vshrl.u32 %v24, 7
  %v26 = vadd.s32 %v25, 8
  %v27 = vadd.s32 %v25, 16
  %v28 = vadd.s32 %v25, 24
  %v29 = vadd.s32 %v25, 32
  %v30 = vadd.s32 %v25, 40
  %v31 = vadd.s32 %v25, 48
  %v32 = vadd.s32 %v25, 56
  %v33 = vadd.s32 %v25, 64
  %v34 = vadd.s32 %v25, 72
  %v35 = vadd.s32 %v25, 80
  %v36 = vadd.s32 %v25, 88
  %v37 = vadd.s32 %v25, 96
  %v38 = vadd.s32 %v25, 104
  %v39 = vadd.s32 %v25, 112
  %v40 = vadd.s32 %v25, 120
  %v41 = vlaneseq
  %v42 = vand.u32 %v41, 127
  %vm43 = vcmp.lt.s32.totalorder %v25, 0
  %v44 = vsub.s32 0, %v25
  %v45 = vsel %vm43, %v44, %v25
  %v46 = vshrl.u32 %v45, 3
  %v47 = vand.u32 %v45, 7
  %v48 = vsub.s32 0, %v47
  %v49 = vsel %vm43, %v48, %v47
  %vm50 = vcmp.lt.s32.totalorder %v26, 0
  %v51 = vsub.s32 0, %v26
  %v52 = vsel %vm50, %v51, %v26
  %v53 = vshrl.u32 %v52, 3
  %v54 = vand.u32 %v52, 7
  %v55 = vsub.s32 0, %v54
  %v56 = vsel %vm50, %v55, %v54
  %vm57 = vcmp.lt.s32.totalorder %v27, 0
  %v58 = vsub.s32 0, %v27
  %v59 = vsel %vm57, %v58, %v27
  %v60 = vshrl.u32 %v59, 3
  %v61 = vand.u32 %v59, 7
  %v62 = vsub.s32 0, %v61
  %v63 = vsel %vm57, %v62, %v61
  %vm64 = vcmp.lt.s32.totalorder %v28, 0
  %v65 = vsub.s32 0, %v28
  %v66 = vsel %vm64, %v65, %v28
  %v67 = vshrl.u32 %v66, 3
  %v68 = vand.u32 %v66, 7
  %v69 = vsub.s32 0, %v68
  %v70 = vsel %vm64, %v69, %v68
  %vm71 = vcmp.lt.s32.totalorder %v29, 0
  %v72 = vsub.s32 0, %v29
  %v73 = vsel %vm71, %v72, %v29
  %v74 = vshrl.u32 %v73, 3
  %v75 = vand.u32 %v73, 7
  %v76 = vsub.s32 0, %v75
  %v77 = vsel %vm71, %v76, %v75
  %vm78 = vcmp.lt.s32.totalorder %v30, 0
  %v79 = vsub.s32 0, %v30
  %v80 = vsel %vm78, %v79, %v30
  %v81 = vshrl.u32 %v80, 3
  %v82 = vand.u32 %v80, 7
  %v83 = vsub.s32 0, %v82
  %v84 = vsel %vm78, %v83, %v82
  %vm85 = vcmp.lt.s32.totalorder %v31, 0
  %v86 = vsub.s32 0, %v31
  %v87 = vsel %vm85, %v86, %v31
  %v88 = vshrl.u32 %v87, 3
  %v89 = vand.u32 %v87, 7
  %v90 = vsub.s32 0, %v89
  %v91 = vsel %vm85, %v90, %v89
  %vm92 = vcmp.lt.s32.totalorder %v32, 0
  %v93 = vsub.s32 0, %v32
  %v94 = vsel %vm92, %v93, %v32
  %v95 = vshrl.u32 %v94, 3
  %v96 = vand.u32 %v94, 7
  %v97 = vsub.s32 0, %v96
  %v98 = vsel %vm92, %v97, %v96
  %vm99 = vcmp.lt.s32.totalorder %v33, 0
  %v100 = vsub.s32 0, %v33
  %v101 = vsel %vm99, %v100, %v33
  %v102 = vshrl.u32 %v101, 3
  %v103 = vand.u32 %v101, 7
  %v104 = vsub.s32 0, %v103
  %v105 = vsel %vm99, %v104, %v103
  %vm106 = vcmp.lt.s32.totalorder %v34, 0
  %v107 = vsub.s32 0, %v34
  %v108 = vsel %vm106, %v107, %v34
  %v109 = vshrl.u32 %v108, 3
  %v110 = vand.u32 %v108, 7
  %v111 = vsub.s32 0, %v110
  %v112 = vsel %vm106, %v111, %v110
  %vm113 = vcmp.lt.s32.totalorder %v35, 0
  %v114 = vsub.s32 0, %v35
  %v115 = vsel %vm113, %v114, %v35
  %v116 = vshrl.u32 %v115, 3
  %v117 = vand.u32 %v115, 7
  %v118 = vsub.s32 0, %v117
  %v119 = vsel %vm113, %v118, %v117
  %vm120 = vcmp.lt.s32.totalorder %v36, 0
  %v121 = vsub.s32 0, %v36
  %v122 = vsel %vm120, %v121, %v36
  %v123 = vshrl.u32 %v122, 3
  %v124 = vand.u32 %v122, 7
  %v125 = vsub.s32 0, %v124
  %v126 = vsel %vm120, %v125, %v124
  %vm127 = vcmp.lt.s32.totalorder %v37, 0
  %v128 = vsub.s32 0, %v37
  %v129 = vsel %vm127, %v128, %v37
  %v130 = vshrl.u32 %v129, 3
  %v131 = vand.u32 %v129, 7
  %v132 = vsub.s32 0, %v131
  %v133 = vsel %vm127, %v132, %v131
  %vm134 = vcmp.lt.s32.totalorder %v38, 0
  %v135 = vsub.s32 0, %v38
  %v136 = vsel %vm134, %v135, %v38
  %v137 = vshrl.u32 %v136, 3
  %v138 = vand.u32 %v136, 7
  %v139 = vsub.s32 0, %v138
  %v140 = vsel %vm134, %v139, %v138
  %vm141 = vcmp.lt.s32.totalorder %v39, 0
  %v142 = vsub.s32 0, %v39
  %v143 = vsel %vm141, %v142, %v39
  %v144 = vshrl.u32 %v143, 3
  %v145 = vand.u32 %v143, 7
  %v146 = vsub.s32 0, %v145
  %v147 = vsel %vm141, %v146, %v145
  %vm148 = vcmp.lt.s32.totalorder %v40, 0
  %v149 = vsub.s32 0, %v40
  %v150 = vsel %vm148, %v149, %v40
  %v151 = vshrl.u32 %v150, 3
  %v152 = vand.u32 %v150, 7
  %v153 = vsub.s32 0, %v152
  %v154 = vsel %vm148, %v153, %v152
  %vm155 = vcmp.ne.s32.totalorder %v49, 0
  %vm156 = vcmp.ne.s32.totalorder %v56, 0
  %vm157 = vcmp.ne.s32.totalorder %v63, 0
  %vm158 = vcmp.ne.s32.totalorder %v70, 0
  %vm159 = vcmp.ne.s32.totalorder %v77, 0
  %vm160 = vcmp.ne.s32.totalorder %v84, 0
  %vm161 = vcmp.ne.s32.totalorder %v91, 0
  %vm162 = vcmp.ne.s32.totalorder %v98, 0
  %vm163 = vcmp.ne.s32.totalorder %v105, 0
  %vm164 = vcmp.ne.s32.totalorder %v112, 0
  %vm165 = vcmp.ne.s32.totalorder %v119, 0
  %vm166 = vcmp.ne.s32.totalorder %v126, 0
  %vm167 = vcmp.ne.s32.totalorder %v133, 0
  %vm168 = vcmp.ne.s32.totalorder %v140, 0
  %vm169 = vcmp.ne.s32.totalorder %v147, 0
  %vm170 = vcmp.ne.s32.totalorder %v154, 0
  %vm171 = vcmp.lt.s32.totalorder %v49, 0
  %vm172 = vcmp.lt.s32.totalorder %v56, 0
  %vm173 = vcmp.lt.s32.totalorder %v63, 0
  %vm174 = vcmp.lt.s32.totalorder %v70, 0
  %vm175 = vcmp.lt.s32.totalorder %v77, 0
  %vm176 = vcmp.lt.s32.totalorder %v84, 0
  %vm177 = vcmp.lt.s32.totalorder %v91, 0
  %vm178 = vcmp.lt.s32.totalorder %v98, 0
  %vm179 = vcmp.lt.s32.totalorder %v105, 0
  %vm180 = vcmp.lt.s32.totalorder %v112, 0
  %vm181 = vcmp.lt.s32.totalorder %v119, 0
  %vm182 = vcmp.lt.s32.totalorder %v126, 0
  %vm183 = vcmp.lt.s32.totalorder %v133, 0
  %vm184 = vcmp.lt.s32.totalorder %v140, 0
  %vm185 = vcmp.lt.s32.totalorder %v147, 0
  %vm186 = vcmp.lt.s32.totalorder %v154, 0
  %vm187 = vmand %vm171, %vm155
  %vm188 = vmand %vm172, %vm156
  %vm189 = vmand %vm173, %vm157
  %vm190 = vmand %vm174, %vm158
  %vm191 = vmand %vm175, %vm159
  %vm192 = vmand %vm176, %vm160
  %vm193 = vmand %vm177, %vm161
  %vm194 = vmand %vm178, %vm162
  %vm195 = vmand %vm179, %vm163
  %vm196 = vmand %vm180, %vm164
  %vm197 = vmand %vm181, %vm165
  %vm198 = vmand %vm182, %vm166
  %vm199 = vmand %vm183, %vm167
  %vm200 = vmand %vm184, %vm168
  %vm201 = vmand %vm185, %vm169
  %vm202 = vmand %vm186, %vm170
  %v203 = vadd.s32 %v49, 8
  %v204 = vadd.s32 %v56, 8
  %v205 = vadd.s32 %v63, 8
  %v206 = vadd.s32 %v70, 8
  %v207 = vadd.s32 %v77, 8
  %v208 = vadd.s32 %v84, 8
  %v209 = vadd.s32 %v91, 8
  %v210 = vadd.s32 %v98, 8
  %v211 = vadd.s32 %v105, 8
  %v212 = vadd.s32 %v112, 8
  %v213 = vadd.s32 %v119, 8
  %v214 = vadd.s32 %v126, 8
  %v215 = vadd.s32 %v133, 8
  %v216 = vadd.s32 %v140, 8
  %v217 = vadd.s32 %v147, 8
  %v218 = vadd.s32 %v154, 8
  %v219 = vsel %vm187, %v203, %v49
  %v220 = vsel %vm188, %v204, %v56
  %v221 = vsel %vm189, %v205, %v63
  %v222 = vsel %vm190, %v206, %v70
  %v223 = vsel %vm191, %v207, %v77
  %v224 = vsel %vm192, %v208, %v84
  %v225 = vsel %vm193, %v209, %v91
  %v226 = vsel %vm194, %v210, %v98
  %v227 = vsel %vm195, %v211, %v105
  %v228 = vsel %vm196, %v212, %v112
  %v229 = vsel %vm197, %v213, %v119
  %v230 = vsel %vm198, %v214, %v126
  %v231 = vsel %vm199, %v215, %v133
  %v232 = vsel %vm200, %v216, %v140
  %v233 = vsel %vm201, %v217, %v147
  %v234 = vsel %vm202, %v218, %v154
  %vm235 = vcmp.eq.s32.totalorder %v219, %v42
  %vm236 = vcmp.eq.s32.totalorder %v220, %v42
  %vm237 = vcmp.eq.s32.totalorder %v221, %v42
  %vm238 = vcmp.eq.s32.totalorder %v222, %v42
  %vm239 = vcmp.eq.s32.totalorder %v223, %v42
  %vm240 = vcmp.eq.s32.totalorder %v224, %v42
  %vm241 = vcmp.eq.s32.totalorder %v225, %v42
  %vm242 = vcmp.eq.s32.totalorder %v226, %v42
  %vm243 = vcmp.eq.s32.totalorder %v227, %v42
  %vm244 = vcmp.eq.s32.totalorder %v228, %v42
  %vm245 = vcmp.eq.s32.totalorder %v229, %v42
  %vm246 = vcmp.eq.s32.totalorder %v230, %v42
  %vm247 = vcmp.eq.s32.totalorder %v231, %v42
  %vm248 = vcmp.eq.s32.totalorder %v232, %v42
  %vm249 = vcmp.eq.s32.totalorder %v233, %v42
  %vm250 = vcmp.eq.s32.totalorder %v234, %v42
  %v251 = vsel %vm235, 1, 0
  %v252 = vsel %vm236, 1, 0
  %v253 = vsel %vm237, 1, 0
  %v254 = vsel %vm238, 1, 0
  %v255 = vsel %vm239, 1, 0
  %v256 = vsel %vm240, 1, 0
  %v257 = vsel %vm241, 1, 0
  %v258 = vsel %vm242, 1, 0
  %v259 = vsel %vm243, 1, 0
  %v260 = vsel %vm244, 1, 0
  %v261 = vsel %vm245, 1, 0
  %v262 = vsel %vm246, 1, 0
  %v263 = vsel %vm247, 1, 0
  %v264 = vsel %vm248, 1, 0
  %v265 = vsel %vm249, 1, 0
  %v266 = vsel %vm250, 1, 0
  %v267 = vcvt.s32.f32 %v251
  %v268 = vcvt.s32.f32 %v252
  %v269 = vcvt.s32.f32 %v253
  %v270 = vcvt.s32.f32 %v254
  %v271 = vcvt.s32.f32 %v255
  %v272 = vcvt.s32.f32 %v256
  %v273 = vcvt.s32.f32 %v257
  %v274 = vcvt.s32.f32 %v258
  %v275 = vcvt.s32.f32 %v259
  %v276 = vcvt.s32.f32 %v260
  %v277 = vcvt.s32.f32 %v261
  %v278 = vcvt.s32.f32 %v262
  %v279 = vcvt.s32.f32 %v263
  %v280 = vcvt.s32.f32 %v264
  %v281 = vcvt.s32.f32 %v265
  %v282 = vcvt.s32.f32 %v266
  %vm283 = vcmp.lt.s32.totalorder %v42, 0
  %v284 = vsub.s32 0, %v42
  %v285 = vsel %vm283, %v284, %v42
  %v286 = vshrl.u32 %v285, 3
  %v287 = vand.u32 %v285, 7
  %v288 = vsub.s32 0, %v287
  %v289 = vsel %vm283, %v288, %v287
  %vm290 = vcmp.ne.s32.totalorder %v289, 0
  %vm291 = vcmp.lt.s32.totalorder %v289, 0
  %vm292 = vmand %vm291, %vm290
  %v293 = vadd.s32 %v289, 8
  %v294 = vsel %vm292, %v293, %v289
  %vm295 = vcmp.eq.s32.totalorder %v294, %v25
  %v296 = vsel %vm295, 1, 0
  %v297 = vcvt.s32.f32 %v296
  %v298 = vld [vmem:[%s4] sm:$0xf]
  %v299 = vld [vmem:[%s0] sm:$0xff]
  %v300 = vld [vmem:[%s0 + $0x8] sm:$0xff]
  %v301 = vld [vmem:[%s0 + $0x18] sm:$0xff]
  %v302 = vld [vmem:[%s0 + $0x20] sm:$0xff]
  %v303 = vpack.c.bf16 %v300, %v299
  %v304 = vpack.c.bf16 %v302, %v301
  %v305 = vld [vmem:[%s1] sm:$0xf]
  %v306 = vld [vmem:[%s1 + $0x4] sm:$0xf]
  %v307 = vld [vmem:[%s1 + $0x8] sm:$0xf]
  %v308 = vld [vmem:[%s1 + $0xc] sm:$0xf]
  %v309 = vld [vmem:[%s1 + $0x10] sm:$0xf]
  %v310 = vld [vmem:[%s1 + $0x14] sm:$0xf]
  %v311 = vld [vmem:[%s1 + $0x18] sm:$0xf]
  %v312 = vld [vmem:[%s1 + $0x1c] sm:$0xf]
  %v313 = vld [vmem:[%s0 + $0x1] sm:$0xff]
  %v314 = vld [vmem:[%s0 + $0x9] sm:$0xff]
  %v315 = vld [vmem:[%s0 + $0x19] sm:$0xff]
  %v316 = vld [vmem:[%s0 + $0x21] sm:$0xff]
  %v317 = vpack.c.bf16 %v314, %v313
  %v318 = vpack.c.bf16 %v316, %v315
  %s319 = scalar_lea.vmem %s1, 32
  %v320 = vld [vmem:[%s319] sm:$0xf]
  %v321 = vld [vmem:[%s319 + $0x4] sm:$0xf]
  %v322 = vld [vmem:[%s319 + $0x8] sm:$0xf]
  %v323 = vld [vmem:[%s319 + $0xc] sm:$0xf]
  %v324 = vld [vmem:[%s319 + $0x10] sm:$0xf]
  %v325 = vld [vmem:[%s319 + $0x14] sm:$0xf]
  %v326 = vld [vmem:[%s319 + $0x18] sm:$0xf]
  %v327 = vld [vmem:[%s319 + $0x1c] sm:$0xf]
  %v336 = vunpack.c.l.b16 %v320
  %v337 = vunpack.c.l.b16 %v321
  %v338 = vunpack.c.l.b16 %v322
  %v339 = vunpack.c.l.b16 %v323
  %v340 = vunpack.c.l.b16 %v324
  %v341 = vunpack.c.l.b16 %v325
  %v342 = vunpack.c.l.b16 %v326
  %v343 = vunpack.c.l.b16 %v327
  %v344 = vpack.c.b16 %v337, %v336
  %v345 = vpack.c.b16 %v339, %v338
  %v346 = vpack.c.b16 %v341, %v340
  %v347 = vpack.c.b16 %v343, %v342
  %vm352 = vcmask 523264
  %v354 = vsel %vm352, %v317, 0
  %v357 = vsel %vm352, %v318, 0
  %359 = vmatprep.subr.bf16.mxu0 0
  %360 = vmatpush1.bf16.msra.mxu0 %v344
  %361 = vmatprep.subr.bf16.mxu0 0
  %362 = vmatpush1.bf16.msra.mxu0 %v345
  %363 = vmatprep.subr.bf16.mxu0 0
  %364 = vmatpush1.bf16.msra.mxu0 %v346
  %365 = vmatprep.subr.bf16.mxu0 0
  %366 = vmatpush1.bf16.msra.mxu0 %v347
  %367 = vmatprep.subr.bf16.mxu0 0
  %368 = vmatpush1.bf16.msra.mxu0 0
  %369 = vmatprep.subr.bf16.mxu0 0
  %370 = vmatpush1.bf16.msra.mxu0 0
  %371 = vmatprep.subr.bf16.mxu0 0
  %372 = vmatpush1.bf16.msra.mxu0 0
  %373 = vmatprep.subr.bf16.mxu0 0
  %374 = vmatpush1.bf16.msra.mxu0 0
  %375 = vmatprep.subr.bf16.mxu0 0
  %376 = vmatpush1.bf16.msra.mxu0 0
  %377 = vmatprep.subr.bf16.mxu0 0
  %378 = vmatpush1.bf16.msra.mxu0 0
  %379 = vmatprep.subr.bf16.mxu0 0
  %380 = vmatpush1.bf16.msra.mxu0 0
  %381 = vmatprep.subr.bf16.mxu0 0
  %382 = vmatpush1.bf16.msra.mxu0 0
  %383 = vmatprep.subr.bf16.mxu0 0
  %384 = vmatpush1.bf16.msra.mxu0 0
  %385 = vmatprep.subr.bf16.mxu0 0
  %386 = vmatpush1.bf16.msra.mxu0 0
  %387 = vmatprep.subr.bf16.mxu0 0
  %388 = vmatpush1.bf16.msra.mxu0 0
  %389 = vmatprep.subr.bf16.mxu0 0
  %390 = vmatpush1.bf16.msra.mxu0 0
  %391 = vmatprep.mubr.bf16.mxu0 0
  %392 = vmatmul.mubr.bf16.gmra.mrb[0].mxu0 %v354
  %v393 = vpop.f32.mrb[0].mxu0
  %v394 = vadd.f32 0.0, %v393
  %v395 = vpop.f32.mrb[0].mxu0
  %v396 = vpop.f32.mrb[0].mxu0
  %v397 = vadd.f32 0.0, %v396
  %v398 = vpop.f32.mrb[0].mxu0
  %399 = vmatprep.mubr.bf16.mxu0 0
  %400 = vmatmul.mubr.bf16.gmra.mrb[0].mxu0 %v357
  %v401 = vpop.f32.mrb[0].mxu0
  %v402 = vadd.f32 0.0, %v401
  %v403 = vpop.f32.mrb[0].mxu0
  %v404 = vpop.f32.mrb[0].mxu0
  %v405 = vadd.f32 0.0, %v404
  %v406 = vpop.f32.mrb[0].mxu0
  %407 = vdwg.mxu0
  %v416 = vunpack.c.l.b16 %v305
  %v417 = vunpack.c.l.b16 %v306
  %v418 = vunpack.c.l.b16 %v307
  %v419 = vunpack.c.l.b16 %v308
  %v420 = vunpack.c.l.b16 %v309
  %v421 = vunpack.c.l.b16 %v310
  %v422 = vunpack.c.l.b16 %v311
  %v423 = vunpack.c.l.b16 %v312
  %v424 = vpack.c.b16 %v417, %v416
  %v425 = vpack.c.b16 %v419, %v418
  %v426 = vpack.c.b16 %v421, %v420
  %v427 = vpack.c.b16 %v423, %v422
  %v433 = vsel %vm352, %v303, 0
  %v436 = vsel %vm352, %v304, 0
  %438 = vmatprep.subr.bf16.mxu0 0
  %439 = vmatpush1.bf16.msra.mxu0 %v424
  %440 = vmatprep.subr.bf16.mxu0 0
  %441 = vmatpush1.bf16.msra.mxu0 %v425
  %442 = vmatprep.subr.bf16.mxu0 0
  %443 = vmatpush1.bf16.msra.mxu0 %v426
  %444 = vmatprep.subr.bf16.mxu0 0
  %445 = vmatpush1.bf16.msra.mxu0 %v427
  %446 = vmatprep.subr.bf16.mxu0 0
  %447 = vmatpush1.bf16.msra.mxu0 0
  %448 = vmatprep.subr.bf16.mxu0 0
  %449 = vmatpush1.bf16.msra.mxu0 0
  %450 = vmatprep.subr.bf16.mxu0 0
  %451 = vmatpush1.bf16.msra.mxu0 0
  %452 = vmatprep.subr.bf16.mxu0 0
  %453 = vmatpush1.bf16.msra.mxu0 0
  %454 = vmatprep.subr.bf16.mxu0 0
  %455 = vmatpush1.bf16.msra.mxu0 0
  %456 = vmatprep.subr.bf16.mxu0 0
  %457 = vmatpush1.bf16.msra.mxu0 0
  %458 = vmatprep.subr.bf16.mxu0 0
  %459 = vmatpush1.bf16.msra.mxu0 0
  %460 = vmatprep.subr.bf16.mxu0 0
  %461 = vmatpush1.bf16.msra.mxu0 0
  %462 = vmatprep.subr.bf16.mxu0 0
  %463 = vmatpush1.bf16.msra.mxu0 0
  %464 = vmatprep.subr.bf16.mxu0 0
  %465 = vmatpush1.bf16.msra.mxu0 0
  %466 = vmatprep.subr.bf16.mxu0 0
  %467 = vmatpush1.bf16.msra.mxu0 0
  %468 = vmatprep.subr.bf16.mxu0 0
  %469 = vmatpush1.bf16.msra.mxu0 0
  %470 = vmatprep.mubr.bf16.mxu0 0
  %471 = vmatmul.mubr.bf16.gmra.mrb[0].mxu0 %v433
  %v472 = vpop.f32.mrb[0].mxu0
  %v473 = vadd.f32 %v394, %v472
  %v474 = vpop.f32.mrb[0].mxu0
  %v475 = vpop.f32.mrb[0].mxu0
  %v476 = vadd.f32 %v397, %v475
  %v477 = vpop.f32.mrb[0].mxu0
  %478 = vmatprep.mubr.bf16.mxu0 0
  %479 = vmatmul.mubr.bf16.gmra.mrb[0].mxu0 %v436
  %v480 = vpop.f32.mrb[0].mxu0
  %v481 = vadd.f32 %v402, %v480
  %v482 = vpop.f32.mrb[0].mxu0
  %v483 = vpop.f32.mrb[0].mxu0
  %v484 = vadd.f32 %v405, %v483
  %v485 = vpop.f32.mrb[0].mxu0
  %486 = vdwg.mxu0
  %v487 = vld [vmem:[%s0 + $0x2] sm:$0xff]
  %v488 = vld [vmem:[%s0 + $0xa] sm:$0xff]
  %v489 = vld [vmem:[%s0 + $0x1a] sm:$0xff]
  %v490 = vld [vmem:[%s0 + $0x22] sm:$0xff]
  %v491 = vpack.c.bf16 %v488, %v487
  %v492 = vpack.c.bf16 %v490, %v489
  %s493 = scalar_lea.vmem %s1, 64
  %v494 = vld [vmem:[%s493] sm:$0xf]
  %v495 = vld [vmem:[%s493 + $0x4] sm:$0xf]
  %v496 = vld [vmem:[%s493 + $0x8] sm:$0xf]
  %v497 = vld [vmem:[%s493 + $0xc] sm:$0xf]
  %v498 = vld [vmem:[%s493 + $0x10] sm:$0xf]
  %v499 = vld [vmem:[%s493 + $0x14] sm:$0xf]
  %v500 = vld [vmem:[%s493 + $0x18] sm:$0xf]
  %v501 = vld [vmem:[%s493 + $0x1c] sm:$0xf]
  %v510 = vunpack.c.l.b16 %v494
  %v511 = vunpack.c.l.b16 %v495
  %v512 = vunpack.c.l.b16 %v496
  %v513 = vunpack.c.l.b16 %v497
  %v514 = vunpack.c.l.b16 %v498
  %v515 = vunpack.c.l.b16 %v499
  %v516 = vunpack.c.l.b16 %v500
  %v517 = vunpack.c.l.b16 %v501
  %v518 = vpack.c.b16 %v511, %v510
  %v519 = vpack.c.b16 %v513, %v512
  %v520 = vpack.c.b16 %v515, %v514
  %v521 = vpack.c.b16 %v517, %v516
  %v527 = vsel %vm352, %v491, 0
  %v530 = vsel %vm352, %v492, 0
  %532 = vmatprep.subr.bf16.mxu0 0
  %533 = vmatpush1.bf16.msra.mxu0 %v518
  %534 = vmatprep.subr.bf16.mxu0 0
  %535 = vmatpush1.bf16.msra.mxu0 %v519
  %536 = vmatprep.subr.bf16.mxu0 0
  %537 = vmatpush1.bf16.msra.mxu0 %v520
  %538 = vmatprep.subr.bf16.mxu0 0
  %539 = vmatpush1.bf16.msra.mxu0 %v521
  %540 = vmatprep.subr.bf16.mxu0 0
  %541 = vmatpush1.bf16.msra.mxu0 0
  %542 = vmatprep.subr.bf16.mxu0 0
  %543 = vmatpush1.bf16.msra.mxu0 0
  %544 = vmatprep.subr.bf16.mxu0 0
  %545 = vmatpush1.bf16.msra.mxu0 0
  %546 = vmatprep.subr.bf16.mxu0 0
  %547 = vmatpush1.bf16.msra.mxu0 0
  %548 = vmatprep.subr.bf16.mxu0 0
  %549 = vmatpush1.bf16.msra.mxu0 0
  %550 = vmatprep.subr.bf16.mxu0 0
  %551 = vmatpush1.bf16.msra.mxu0 0
  %552 = vmatprep.subr.bf16.mxu0 0
  %553 = vmatpush1.bf16.msra.mxu0 0
  %554 = vmatprep.subr.bf16.mxu0 0
  %555 = vmatpush1.bf16.msra.mxu0 0
  %556 = vmatprep.subr.bf16.mxu0 0
  %557 = vmatpush1.bf16.msra.mxu0 0
  %558 = vmatprep.subr.bf16.mxu0 0
  %559 = vmatpush1.bf16.msra.mxu0 0
  %560 = vmatprep.subr.bf16.mxu0 0
  %561 = vmatpush1.bf16.msra.mxu0 0
  %562 = vmatprep.subr.bf16.mxu0 0
  %563 = vmatpush1.bf16.msra.mxu0 0
  %564 = vmatprep.mubr.bf16.mxu0 0
  %565 = vmatmul.mubr.bf16.gmra.mrb[0].mxu0 %v527
  %v566 = vpop.f32.mrb[0].mxu0
  %v567 = vadd.f32 0.0, %v566
  %v568 = vpop.f32.mrb[0].mxu0
  %v569 = vpop.f32.mrb[0].mxu0
  %v570 = vadd.f32 0.0, %v569
  %v571 = vpop.f32.mrb[0].mxu0
  %572 = vmatprep.mubr.bf16.mxu0 0
  %573 = vmatmul.mubr.bf16.gmra.mrb[0].mxu0 %v530
  %v574 = vpop.f32.mrb[0].mxu0
  %v575 = vadd.f32 0.0, %v574
  %v576 = vpop.f32.mrb[0].mxu0
  %v577 = vpop.f32.mrb[0].mxu0
  %v578 = vadd.f32 0.0, %v577
  %v579 = vpop.f32.mrb[0].mxu0
  %580 = vdwg.mxu0
  %v581 = vadd.f32 %v473, %v567
  %v582 = vadd.f32 %v476, %v570
  %v583 = vadd.f32 %v481, %v575
  %v584 = vadd.f32 %v484, %v578
  %v585 = vadd.f32 %v581, %v582
  %v586 = vadd.f32 %v585, %v583
  %v587 = vadd.f32 %v586, %v584
  %v588 = vrot.slane %v587, 4
  %v589 = vadd.f32 %v587, %v588
  %v590 = vrot.slane %v589, 2
  %v591 = vadd.f32 %v589, %v590
  %v592 = vrot.slane %v591, 1
  %v593 = vadd.f32 %v591, %v592
  %v594 = vmul.f32 %v581, %v581
  %v595 = vmul.f32 %v582, %v582
  %v596 = vmul.f32 %v583, %v583
  %v597 = vmul.f32 %v584, %v584
  %v598 = vadd.f32 %v594, %v595
  %v599 = vadd.f32 %v598, %v596
  %v600 = vadd.f32 %v599, %v597
  %v601 = vrot.slane %v600, 4
  %v602 = vadd.f32 %v600, %v601
  %v603 = vrot.slane %v602, 2
  %v604 = vadd.f32 %v602, %v603
  %v605 = vrot.slane %v604, 1
  %v606 = vadd.f32 %v604, %v605
  %607 = vmatprep.subr.mxu0 0.0
  %608 = vmatpush1.msra.mxu0 %v267
  %609 = vmatprep.subr.mxu0 0.0
  %610 = vmatpush1.msra.mxu0 %v268
  %611 = vmatprep.subr.mxu0 0.0
  %612 = vmatpush1.msra.mxu0 %v269
  %613 = vmatprep.subr.mxu0 0.0
  %614 = vmatpush1.msra.mxu0 %v270
  %615 = vmatprep.subr.mxu0 0.0
  %616 = vmatpush1.msra.mxu0 %v271
  %617 = vmatprep.subr.mxu0 0.0
  %618 = vmatpush1.msra.mxu0 %v272
  %619 = vmatprep.subr.mxu0 0.0
  %620 = vmatpush1.msra.mxu0 %v273
  %621 = vmatprep.subr.mxu0 0.0
  %622 = vmatpush1.msra.mxu0 %v274
  %623 = vmatprep.subr.mxu0 0.0
  %624 = vmatpush1.msra.mxu0 %v275
  %625 = vmatprep.subr.mxu0 0.0
  %626 = vmatpush1.msra.mxu0 %v276
  %627 = vmatprep.subr.mxu0 0.0
  %628 = vmatpush1.msra.mxu0 %v277
  %629 = vmatprep.subr.mxu0 0.0
  %630 = vmatpush1.msra.mxu0 %v278
  %631 = vmatprep.subr.mxu0 0.0
  %632 = vmatpush1.msra.mxu0 %v279
  %633 = vmatprep.subr.mxu0 0.0
  %634 = vmatpush1.msra.mxu0 %v280
  %635 = vmatprep.subr.mxu0 0.0
  %636 = vmatpush1.msra.mxu0 %v281
  %637 = vmatprep.subr.mxu0 0.0
  %638 = vmatpush1.msra.mxu0 %v282
  %639 = vmatprep.subr.mxu0 0.0
  %640 = vmatpush1.msra.mxu0 0.0
  %641 = vmatprep.subr.mxu0 0.0
  %642 = vmatpush1.msra.mxu0 0.0
  %643 = vmatprep.subr.mxu0 0.0
  %644 = vmatpush1.msra.mxu0 0.0
  %645 = vmatprep.subr.mxu0 0.0
  %646 = vmatpush1.msra.mxu0 0.0
  %647 = vmatprep.subr.mxu0 0.0
  %648 = vmatpush1.msra.mxu0 0.0
  %649 = vmatprep.subr.mxu0 0.0
  %650 = vmatpush1.msra.mxu0 0.0
  %651 = vmatprep.subr.mxu0 0.0
  %652 = vmatpush1.msra.mxu0 0.0
  %653 = vmatprep.subr.mxu0 0.0
  %654 = vmatpush1.msra.mxu0 0.0
  %655 = vmatprep.subr.mxu0 0.0
  %656 = vmatpush1.msra.mxu0 0.0
  %657 = vmatprep.subr.mxu0 0.0
  %658 = vmatpush1.msra.mxu0 0.0
  %659 = vmatprep.subr.mxu0 0.0
  %660 = vmatpush1.msra.mxu0 0.0
  %661 = vmatprep.subr.mxu0 0.0
  %662 = vmatpush1.msra.mxu0 0.0
  %663 = vmatprep.subr.mxu0 0.0
  %664 = vmatpush1.msra.mxu0 0.0
  %665 = vmatprep.subr.mxu0 0.0
  %666 = vmatpush1.msra.mxu0 0.0
  %667 = vmatprep.subr.mxu0 0.0
  %668 = vmatpush1.msra.mxu0 0.0
  %669 = vmatprep.subr.mxu0 0.0
  %670 = vmatpush1.msra.mxu0 0.0
  %671 = vmatprep.mubr.f32.mxu0 0.0
  %672 = vmatmul.mubr.f32.gmra.mrb[0].mxu0 %v593
  %v673 = vpop.f32.mrb[0].mxu0
  %v674 = vadd.f32 0.0, %v673
  %v675 = vpop.f32.mrb[0].mxu0
  %676 = vdwg.mxu0
  %677 = vmatprep.subr.mxu0 0.0
  %678 = vmatpush1.msra.mxu0 %v267
  %679 = vmatprep.subr.mxu0 0.0
  %680 = vmatpush1.msra.mxu0 %v268
  %681 = vmatprep.subr.mxu0 0.0
  %682 = vmatpush1.msra.mxu0 %v269
  %683 = vmatprep.subr.mxu0 0.0
  %684 = vmatpush1.msra.mxu0 %v270
  %685 = vmatprep.subr.mxu0 0.0
  %686 = vmatpush1.msra.mxu0 %v271
  %687 = vmatprep.subr.mxu0 0.0
  %688 = vmatpush1.msra.mxu0 %v272
  %689 = vmatprep.subr.mxu0 0.0
  %690 = vmatpush1.msra.mxu0 %v273
  %691 = vmatprep.subr.mxu0 0.0
  %692 = vmatpush1.msra.mxu0 %v274
  %693 = vmatprep.subr.mxu0 0.0
  %694 = vmatpush1.msra.mxu0 %v275
  %695 = vmatprep.subr.mxu0 0.0
  %696 = vmatpush1.msra.mxu0 %v276
  %697 = vmatprep.subr.mxu0 0.0
  %698 = vmatpush1.msra.mxu0 %v277
  %699 = vmatprep.subr.mxu0 0.0
  %700 = vmatpush1.msra.mxu0 %v278
  %701 = vmatprep.subr.mxu0 0.0
  %702 = vmatpush1.msra.mxu0 %v279
  %703 = vmatprep.subr.mxu0 0.0
  %704 = vmatpush1.msra.mxu0 %v280
  %705 = vmatprep.subr.mxu0 0.0
  %706 = vmatpush1.msra.mxu0 %v281
  %707 = vmatprep.subr.mxu0 0.0
  %708 = vmatpush1.msra.mxu0 %v282
  %709 = vmatprep.subr.mxu0 0.0
  %710 = vmatpush1.msra.mxu0 0.0
  %711 = vmatprep.subr.mxu0 0.0
  %712 = vmatpush1.msra.mxu0 0.0
  %713 = vmatprep.subr.mxu0 0.0
  %714 = vmatpush1.msra.mxu0 0.0
  %715 = vmatprep.subr.mxu0 0.0
  %716 = vmatpush1.msra.mxu0 0.0
  %717 = vmatprep.subr.mxu0 0.0
  %718 = vmatpush1.msra.mxu0 0.0
  %719 = vmatprep.subr.mxu0 0.0
  %720 = vmatpush1.msra.mxu0 0.0
  %721 = vmatprep.subr.mxu0 0.0
  %722 = vmatpush1.msra.mxu0 0.0
  %723 = vmatprep.subr.mxu0 0.0
  %724 = vmatpush1.msra.mxu0 0.0
  %725 = vmatprep.subr.mxu0 0.0
  %726 = vmatpush1.msra.mxu0 0.0
  %727 = vmatprep.subr.mxu0 0.0
  %728 = vmatpush1.msra.mxu0 0.0
  %729 = vmatprep.subr.mxu0 0.0
  %730 = vmatpush1.msra.mxu0 0.0
  %731 = vmatprep.subr.mxu0 0.0
  %732 = vmatpush1.msra.mxu0 0.0
  %733 = vmatprep.subr.mxu0 0.0
  %734 = vmatpush1.msra.mxu0 0.0
  %735 = vmatprep.subr.mxu0 0.0
  %736 = vmatpush1.msra.mxu0 0.0
  %737 = vmatprep.subr.mxu0 0.0
  %738 = vmatpush1.msra.mxu0 0.0
  %739 = vmatprep.subr.mxu0 0.0
  %740 = vmatpush1.msra.mxu0 0.0
  %741 = vmatprep.mubr.f32.mxu0 0.0
  %742 = vmatmul.mubr.f32.gmra.mrb[0].mxu0 %v606
  %v743 = vpop.f32.mrb[0].mxu0
  %v744 = vadd.f32 0.0, %v743
  %v745 = vpop.f32.mrb[0].mxu0
  %746 = vdwg.mxu0
  %v747 = vrcp.pop 512.0
  %v748 = vmul.f32 %v674, %v747
  %v749 = vmul.f32 %v744, %v747
  %v750 = vmul.f32 %v748, %v748
  %v751 = vsub.f32 %v749, %v750
  %v752 = vadd.f32 %v751, 1e-05
  %v753 = vrsqrt.pop %v752
  %v754 = vmul.f32 %v298, %v753
  %v755 = vmul.f32 %v748, %v754
  %v757 = vrot.slane %v755, 7
  %v759 = vsub.f32 %v298, %v757
  %vm760 = vcmask 64512
  %v762 = vsel %vm760, %v754, 0
  %764 = vmatprep.subr.mxu0 0.0
  %765 = vmatpush1.msra.mxu0 %v297
  %766 = vmatprep.subr.mxu0 0.0
  %767 = vmatpush1.msra.mxu0 0.0
  %768 = vmatprep.subr.mxu0 0.0
  %769 = vmatpush1.msra.mxu0 0.0
  %770 = vmatprep.subr.mxu0 0.0
  %771 = vmatpush1.msra.mxu0 0.0
  %772 = vmatprep.subr.mxu0 0.0
  %773 = vmatpush1.msra.mxu0 0.0
  %774 = vmatprep.subr.mxu0 0.0
  %775 = vmatpush1.msra.mxu0 0.0
  %776 = vmatprep.subr.mxu0 0.0
  %777 = vmatpush1.msra.mxu0 0.0
  %778 = vmatprep.subr.mxu0 0.0
  %779 = vmatpush1.msra.mxu0 0.0
  %780 = vmatprep.subr.mxu0 0.0
  %781 = vmatpush1.msra.mxu0 0.0
  %782 = vmatprep.subr.mxu0 0.0
  %783 = vmatpush1.msra.mxu0 0.0
  %784 = vmatprep.subr.mxu0 0.0
  %785 = vmatpush1.msra.mxu0 0.0
  %786 = vmatprep.subr.mxu0 0.0
  %787 = vmatpush1.msra.mxu0 0.0
  %788 = vmatprep.subr.mxu0 0.0
  %789 = vmatpush1.msra.mxu0 0.0
  %790 = vmatprep.subr.mxu0 0.0
  %791 = vmatpush1.msra.mxu0 0.0
  %792 = vmatprep.subr.mxu0 0.0
  %793 = vmatpush1.msra.mxu0 0.0
  %794 = vmatprep.subr.mxu0 0.0
  %795 = vmatpush1.msra.mxu0 0.0
  %796 = vmatprep.subr.mxu0 0.0
  %797 = vmatpush1.msra.mxu0 0.0
  %798 = vmatprep.subr.mxu0 0.0
  %799 = vmatpush1.msra.mxu0 0.0
  %800 = vmatprep.subr.mxu0 0.0
  %801 = vmatpush1.msra.mxu0 0.0
  %802 = vmatprep.subr.mxu0 0.0
  %803 = vmatpush1.msra.mxu0 0.0
  %804 = vmatprep.subr.mxu0 0.0
  %805 = vmatpush1.msra.mxu0 0.0
  %806 = vmatprep.subr.mxu0 0.0
  %807 = vmatpush1.msra.mxu0 0.0
  %808 = vmatprep.subr.mxu0 0.0
  %809 = vmatpush1.msra.mxu0 0.0
  %810 = vmatprep.subr.mxu0 0.0
  %811 = vmatpush1.msra.mxu0 0.0
  %812 = vmatprep.subr.mxu0 0.0
  %813 = vmatpush1.msra.mxu0 0.0
  %814 = vmatprep.subr.mxu0 0.0
  %815 = vmatpush1.msra.mxu0 0.0
  %816 = vmatprep.subr.mxu0 0.0
  %817 = vmatpush1.msra.mxu0 0.0
  %818 = vmatprep.subr.mxu0 0.0
  %819 = vmatpush1.msra.mxu0 0.0
  %820 = vmatprep.subr.mxu0 0.0
  %821 = vmatpush1.msra.mxu0 0.0
  %822 = vmatprep.subr.mxu0 0.0
  %823 = vmatpush1.msra.mxu0 0.0
  %824 = vmatprep.subr.mxu0 0.0
  %825 = vmatpush1.msra.mxu0 0.0
  %826 = vmatprep.subr.mxu0 0.0
  %827 = vmatpush1.msra.mxu0 0.0
  %828 = vmatprep.mubr.f32.mxu0 0.0
  %829 = vmatmul.mubr.f32.gmra.mrb[0].mxu0 %v762
  %v830 = vpop.f32.mrb[0].mxu0
  %v831 = vadd.f32 0.0, %v830
  %v832 = vpop.f32.mrb[0].mxu0
  %833 = vdwg.mxu0
  %v835 = vrot.slane %v759, 1
  %v836 = vsel %vm760, %v835, 0
  %838 = vmatprep.subr.mxu0 0.0
  %839 = vmatpush1.msra.mxu0 %v297
  %840 = vmatprep.subr.mxu0 0.0
  %841 = vmatpush1.msra.mxu0 0.0
  %842 = vmatprep.subr.mxu0 0.0
  %843 = vmatpush1.msra.mxu0 0.0
  %844 = vmatprep.subr.mxu0 0.0
  %845 = vmatpush1.msra.mxu0 0.0
  %846 = vmatprep.subr.mxu0 0.0
  %847 = vmatpush1.msra.mxu0 0.0
  %848 = vmatprep.subr.mxu0 0.0
  %849 = vmatpush1.msra.mxu0 0.0
  %850 = vmatprep.subr.mxu0 0.0
  %851 = vmatpush1.msra.mxu0 0.0
  %852 = vmatprep.subr.mxu0 0.0
  %853 = vmatpush1.msra.mxu0 0.0
  %854 = vmatprep.subr.mxu0 0.0
  %855 = vmatpush1.msra.mxu0 0.0
  %856 = vmatprep.subr.mxu0 0.0
  %857 = vmatpush1.msra.mxu0 0.0
  %858 = vmatprep.subr.mxu0 0.0
  %859 = vmatpush1.msra.mxu0 0.0
  %860 = vmatprep.subr.mxu0 0.0
  %861 = vmatpush1.msra.mxu0 0.0
  %862 = vmatprep.subr.mxu0 0.0
  %863 = vmatpush1.msra.mxu0 0.0
  %864 = vmatprep.subr.mxu0 0.0
  %865 = vmatpush1.msra.mxu0 0.0
  %866 = vmatprep.subr.mxu0 0.0
  %867 = vmatpush1.msra.mxu0 0.0
  %868 = vmatprep.subr.mxu0 0.0
  %869 = vmatpush1.msra.mxu0 0.0
  %870 = vmatprep.subr.mxu0 0.0
  %871 = vmatpush1.msra.mxu0 0.0
  %872 = vmatprep.subr.mxu0 0.0
  %873 = vmatpush1.msra.mxu0 0.0
  %874 = vmatprep.subr.mxu0 0.0
  %875 = vmatpush1.msra.mxu0 0.0
  %876 = vmatprep.subr.mxu0 0.0
  %877 = vmatpush1.msra.mxu0 0.0
  %878 = vmatprep.subr.mxu0 0.0
  %879 = vmatpush1.msra.mxu0 0.0
  %880 = vmatprep.subr.mxu0 0.0
  %881 = vmatpush1.msra.mxu0 0.0
  %882 = vmatprep.subr.mxu0 0.0
  %883 = vmatpush1.msra.mxu0 0.0
  %884 = vmatprep.subr.mxu0 0.0
  %885 = vmatpush1.msra.mxu0 0.0
  %886 = vmatprep.subr.mxu0 0.0
  %887 = vmatpush1.msra.mxu0 0.0
  %888 = vmatprep.subr.mxu0 0.0
  %889 = vmatpush1.msra.mxu0 0.0
  %890 = vmatprep.subr.mxu0 0.0
  %891 = vmatpush1.msra.mxu0 0.0
  %892 = vmatprep.subr.mxu0 0.0
  %893 = vmatpush1.msra.mxu0 0.0
  %894 = vmatprep.subr.mxu0 0.0
  %895 = vmatpush1.msra.mxu0 0.0
  %896 = vmatprep.subr.mxu0 0.0
  %897 = vmatpush1.msra.mxu0 0.0
  %898 = vmatprep.subr.mxu0 0.0
  %899 = vmatpush1.msra.mxu0 0.0
  %900 = vmatprep.subr.mxu0 0.0
  %901 = vmatpush1.msra.mxu0 0.0
  %902 = vmatprep.mubr.f32.mxu0 0.0
  %903 = vmatmul.mubr.f32.gmra.mrb[0].mxu0 %v836
  %v904 = vpop.f32.mrb[0].mxu0
  %v905 = vadd.f32 0.0, %v904
  %v906 = vpop.f32.mrb[0].mxu0
  %907 = vdwg.mxu0
  %v908 = vlaneseq
  %v909 = vshrl.u32 %v908, 7
  %v910 = vsub.s32 0, %v909
  %v911 = vrot.slane %v831, %v910
  %v912 = vmul.f32 %v581, %v911
  %v913 = vmul.f32 %v582, %v911
  %v914 = vmul.f32 %v583, %v911
  %v915 = vmul.f32 %v584, %v911
  %v916 = vlaneseq
  %v917 = vshrl.u32 %v916, 7
  %v918 = vsub.s32 0, %v917
  %v919 = vrot.slane %v905, %v918
  %v920 = vadd.f32 %v912, %v919
  %v921 = vadd.f32 %v913, %v919
  %v922 = vadd.f32 %v914, %v919
  %v923 = vadd.f32 %v915, %v919
  %v924 = vmax.f32 %v920, 0.0
  %v925 = vmax.f32 %v921, 0.0
  %v926 = vmax.f32 %v922, 0.0
  %v927 = vmax.f32 %v923, 0.0
  %928 = vst [vmem:[#allocation2] sm:$0x1] 0.0
  %929 = vst [vmem:[#allocation2 + $0x18] sm:$0x1] 0.0
  %930 = vst [vmem:[#allocation2 + $0x11] sm:$0x1] 0.0
  %931 = vst [vmem:[#allocation2 + $0x29] sm:$0x1] 0.0
  %932 = vst [vmem:[#allocation2 + $0x1] sm:$0xff] %v924
  %933 = vst [vmem:[#allocation2 + $0x9] sm:$0xff] %v925
  %934 = vst [vmem:[#allocation2 + $0x19] sm:$0xff] %v926
  %935 = vst [vmem:[#allocation2 + $0x21] sm:$0xff] %v927
  %v936 = vld [vmem:[#allocation2] sm:$0xff]
  %v937 = vld [vmem:[#allocation2 + $0x8] sm:$0xff]
  %v938 = vld [vmem:[#allocation2 + $0x18] sm:$0xff]
  %v939 = vld [vmem:[#allocation2 + $0x20] sm:$0xff]
  %v940 = vpack.c.bf16 %v937, %v936
  %v941 = vpack.c.bf16 %v939, %v938
  %v942 = vld [vmem:[%s2] sm:$0xf]
  %v943 = vld [vmem:[%s2 + $0x4] sm:$0xf]
  %v944 = vld [vmem:[%s2 + $0x8] sm:$0xf]
  %v945 = vld [vmem:[%s2 + $0xc] sm:$0xf]
  %v946 = vld [vmem:[%s2 + $0x10] sm:$0xf]
  %v947 = vld [vmem:[%s2 + $0x14] sm:$0xf]
  %v948 = vld [vmem:[%s2 + $0x18] sm:$0xf]
  %v949 = vld [vmem:[%s2 + $0x1c] sm:$0xf]
  %v950 = vld [vmem:[%s2 + $0x20] sm:$0xf]
  %v951 = vld [vmem:[%s2 + $0x24] sm:$0xf]
  %v952 = vld [vmem:[%s2 + $0x28] sm:$0xf]
  %v953 = vld [vmem:[%s2 + $0x2c] sm:$0xf]
  %v954 = vld [vmem:[%s2 + $0x30] sm:$0xf]
  %v955 = vld [vmem:[%s2 + $0x34] sm:$0xf]
  %v956 = vld [vmem:[%s2 + $0x38] sm:$0xf]
  %v957 = vld [vmem:[%s2 + $0x3c] sm:$0xf]
  %v958 = vld [vmem:[#allocation2 + $0x1] sm:$0xff]
  %v959 = vld [vmem:[#allocation2 + $0x9] sm:$0xff]
  %v960 = vld [vmem:[#allocation2 + $0x19] sm:$0xff]
  %v961 = vld [vmem:[#allocation2 + $0x21] sm:$0xff]
  %v962 = vpack.c.bf16 %v959, %v958
  %v963 = vpack.c.bf16 %v961, %v960
  %s964 = scalar_lea.vmem %s2, 64
  %v965 = vld [vmem:[%s964] sm:$0xf]
  %v966 = vld [vmem:[%s964 + $0x4] sm:$0xf]
  %v967 = vld [vmem:[%s964 + $0x8] sm:$0xf]
  %v968 = vld [vmem:[%s964 + $0xc] sm:$0xf]
  %v969 = vld [vmem:[%s964 + $0x10] sm:$0xf]
  %v970 = vld [vmem:[%s964 + $0x14] sm:$0xf]
  %v971 = vld [vmem:[%s964 + $0x18] sm:$0xf]
  %v972 = vld [vmem:[%s964 + $0x1c] sm:$0xf]
  %v973 = vld [vmem:[%s964 + $0x20] sm:$0xf]
  %v974 = vld [vmem:[%s964 + $0x24] sm:$0xf]
  %v975 = vld [vmem:[%s964 + $0x28] sm:$0xf]
  %v976 = vld [vmem:[%s964 + $0x2c] sm:$0xf]
  %v977 = vld [vmem:[%s964 + $0x30] sm:$0xf]
  %v978 = vld [vmem:[%s964 + $0x34] sm:$0xf]
  %v979 = vld [vmem:[%s964 + $0x38] sm:$0xf]
  %v980 = vld [vmem:[%s964 + $0x3c] sm:$0xf]
  %v997 = vunpack.c.l.b16 %v965
  %v998 = vunpack.c.l.b16 %v966
  %v999 = vunpack.c.l.b16 %v967
  %v1000 = vunpack.c.l.b16 %v968
  %v1001 = vunpack.c.l.b16 %v969
  %v1002 = vunpack.c.l.b16 %v970
  %v1003 = vunpack.c.l.b16 %v971
  %v1004 = vunpack.c.l.b16 %v972
  %v1005 = vunpack.c.l.b16 %v973
  %v1006 = vunpack.c.l.b16 %v974
  %v1007 = vunpack.c.l.b16 %v975
  %v1008 = vunpack.c.l.b16 %v976
  %v1009 = vunpack.c.l.b16 %v977
  %v1010 = vunpack.c.l.b16 %v978
  %v1011 = vunpack.c.l.b16 %v979
  %v1012 = vunpack.c.l.b16 %v980
  %v1013 = vpack.c.b16 %v998, %v997
  %v1014 = vpack.c.b16 %v1000, %v999
  %v1015 = vpack.c.b16 %v1002, %v1001
  %v1016 = vpack.c.b16 %v1004, %v1003
  %v1017 = vpack.c.b16 %v1006, %v1005
  %v1018 = vpack.c.b16 %v1008, %v1007
  %v1019 = vpack.c.b16 %v1010, %v1009
  %v1020 = vpack.c.b16 %v1012, %v1011
  %1029 = vmatprep.subr.bf16.mxu0 0
  %1030 = vmatpush1.bf16.msra.mxu0 %v1013
  %1031 = vmatprep.subr.bf16.mxu0 0
  %1032 = vmatpush1.bf16.msra.mxu0 %v1014
  %1033 = vmatprep.subr.bf16.mxu0 0
  %1034 = vmatpush1.bf16.msra.mxu0 %v1015
  %1035 = vmatprep.subr.bf16.mxu0 0
  %1036 = vmatpush1.bf16.msra.mxu0 %v1016
  %1037 = vmatprep.subr.bf16.mxu0 0
  %1038 = vmatpush1.bf16.msra.mxu0 %v1017
  %1039 = vmatprep.subr.bf16.mxu0 0
  %1040 = vmatpush1.bf16.msra.mxu0 %v1018
  %1041 = vmatprep.subr.bf16.mxu0 0
  %1042 = vmatpush1.bf16.msra.mxu0 %v1019
  %1043 = vmatprep.subr.bf16.mxu0 0
  %1044 = vmatpush1.bf16.msra.mxu0 %v1020
  %1045 = vmatprep.subr.bf16.mxu0 0
  %1046 = vmatpush1.bf16.msra.mxu0 0
  %1047 = vmatprep.subr.bf16.mxu0 0
  %1048 = vmatpush1.bf16.msra.mxu0 0
  %1049 = vmatprep.subr.bf16.mxu0 0
  %1050 = vmatpush1.bf16.msra.mxu0 0
  %1051 = vmatprep.subr.bf16.mxu0 0
  %1052 = vmatpush1.bf16.msra.mxu0 0
  %1053 = vmatprep.subr.bf16.mxu0 0
  %1054 = vmatpush1.bf16.msra.mxu0 0
  %1055 = vmatprep.subr.bf16.mxu0 0
  %1056 = vmatpush1.bf16.msra.mxu0 0
  %1057 = vmatprep.subr.bf16.mxu0 0
  %1058 = vmatpush1.bf16.msra.mxu0 0
  %1059 = vmatprep.subr.bf16.mxu0 0
  %1060 = vmatpush1.bf16.msra.mxu0 0
  %1061 = vmatprep.mubr.bf16.mxu0 0
  %1062 = vmatmul.mubr.bf16.gmra.mrb[0].mxu0 %v962
  %v1063 = vpop.f32.mrb[0].mxu0
  %v1064 = vadd.f32 0.0, %v1063
  %v1065 = vpop.f32.mrb[0].mxu0
  %v1066 = vpop.f32.mrb[0].mxu0
  %v1067 = vadd.f32 0.0, %v1066
  %v1068 = vpop.f32.mrb[0].mxu0
  %1069 = vmatprep.mubr.bf16.mxu0 0
  %1070 = vmatmul.mubr.bf16.gmra.mrb[0].mxu0 %v963
  %v1071 = vpop.f32.mrb[0].mxu0
  %v1072 = vadd.f32 0.0, %v1071
  %v1073 = vpop.f32.mrb[0].mxu0
  %v1074 = vpop.f32.mrb[0].mxu0
  %v1075 = vadd.f32 0.0, %v1074
  %v1076 = vpop.f32.mrb[0].mxu0
  %1077 = vdwg.mxu0
  %v1094 = vunpack.c.l.b16 %v942
  %v1095 = vunpack.c.l.b16 %v943
  %v1096 = vunpack.c.l.b16 %v944
  %v1097 = vunpack.c.l.b16 %v945
  %v1098 = vunpack.c.l.b16 %v946
  %v1099 = vunpack.c.l.b16 %v947
  %v1100 = vunpack.c.l.b16 %v948
  %v1101 = vunpack.c.l.b16 %v949
  %v1102 = vunpack.c.l.b16 %v950
  %v1103 = vunpack.c.l.b16 %v951
  %v1104 = vunpack.c.l.b16 %v952
  %v1105 = vunpack.c.l.b16 %v953
  %v1106 = vunpack.c.l.b16 %v954
  %v1107 = vunpack.c.l.b16 %v955
  %v1108 = vunpack.c.l.b16 %v956
  %v1109 = vunpack.c.l.b16 %v957
  %v1110 = vpack.c.b16 %v1095, %v1094
  %v1111 = vpack.c.b16 %v1097, %v1096
  %v1112 = vpack.c.b16 %v1099, %v1098
  %v1113 = vpack.c.b16 %v1101, %v1100
  %v1114 = vpack.c.b16 %v1103, %v1102
  %v1115 = vpack.c.b16 %v1105, %v1104
  %v1116 = vpack.c.b16 %v1107, %v1106
  %v1117 = vpack.c.b16 %v1109, %v1108
  %1126 = vmatprep.subr.bf16.mxu0 0
  %1127 = vmatpush1.bf16.msra.mxu0 %v1110
  %1128 = vmatprep.subr.bf16.mxu0 0
  %1129 = vmatpush1.bf16.msra.mxu0 %v1111
  %1130 = vmatprep.subr.bf16.mxu0 0
  %1131 = vmatpush1.bf16.msra.mxu0 %v1112
  %1132 = vmatprep.subr.bf16.mxu0 0
  %1133 = vmatpush1.bf16.msra.mxu0 %v1113
  %1134 = vmatprep.subr.bf16.mxu0 0
  %1135 = vmatpush1.bf16.msra.mxu0 %v1114
  %1136 = vmatprep.subr.bf16.mxu0 0
  %1137 = vmatpush1.bf16.msra.mxu0 %v1115
  %1138 = vmatprep.subr.bf16.mxu0 0
  %1139 = vmatpush1.bf16.msra.mxu0 %v1116
  %1140 = vmatprep.subr.bf16.mxu0 0
  %1141 = vmatpush1.bf16.msra.mxu0 %v1117
  %1142 = vmatprep.subr.bf16.mxu0 0
  %1143 = vmatpush1.bf16.msra.mxu0 0
  %1144 = vmatprep.subr.bf16.mxu0 0
  %1145 = vmatpush1.bf16.msra.mxu0 0
  %1146 = vmatprep.subr.bf16.mxu0 0
  %1147 = vmatpush1.bf16.msra.mxu0 0
  %1148 = vmatprep.subr.bf16.mxu0 0
  %1149 = vmatpush1.bf16.msra.mxu0 0
  %1150 = vmatprep.subr.bf16.mxu0 0
  %1151 = vmatpush1.bf16.msra.mxu0 0
  %1152 = vmatprep.subr.bf16.mxu0 0
  %1153 = vmatpush1.bf16.msra.mxu0 0
  %1154 = vmatprep.subr.bf16.mxu0 0
  %1155 = vmatpush1.bf16.msra.mxu0 0
  %1156 = vmatprep.subr.bf16.mxu0 0
  %1157 = vmatpush1.bf16.msra.mxu0 0
  %1158 = vmatprep.mubr.bf16.mxu0 0
  %1159 = vmatmul.mubr.bf16.gmra.mrb[0].mxu0 %v940
  %v1160 = vpop.f32.mrb[0].mxu0
  %v1161 = vadd.f32 %v1064, %v1160
  %v1162 = vpop.f32.mrb[0].mxu0
  %v1163 = vpop.f32.mrb[0].mxu0
  %v1164 = vadd.f32 %v1067, %v1163
  %v1165 = vpop.f32.mrb[0].mxu0
  %1166 = vmatprep.mubr.bf16.mxu0 0
  %1167 = vmatmul.mubr.bf16.gmra.mrb[0].mxu0 %v941
  %v1168 = vpop.f32.mrb[0].mxu0
  %v1169 = vadd.f32 %v1072, %v1168
  %v1170 = vpop.f32.mrb[0].mxu0
  %v1171 = vpop.f32.mrb[0].mxu0
  %v1172 = vadd.f32 %v1075, %v1171
  %v1173 = vpop.f32.mrb[0].mxu0
  %1174 = vdwg.mxu0
  %v1175 = vld [vmem:[#allocation2 + $0x2] sm:$0xff]
  %v1176 = vld [vmem:[#allocation2 + $0xa] sm:$0xff]
  %v1177 = vld [vmem:[#allocation2 + $0x1a] sm:$0xff]
  %v1178 = vld [vmem:[#allocation2 + $0x22] sm:$0xff]
  %v1179 = vpack.c.bf16 %v1176, %v1175
  %v1180 = vpack.c.bf16 %v1178, %v1177
  %s1181 = scalar_lea.vmem %s2, 128
  %v1182 = vld [vmem:[%s1181] sm:$0xf]
  %v1183 = vld [vmem:[%s1181 + $0x4] sm:$0xf]
  %v1184 = vld [vmem:[%s1181 + $0x8] sm:$0xf]
  %v1185 = vld [vmem:[%s1181 + $0xc] sm:$0xf]
  %v1186 = vld [vmem:[%s1181 + $0x10] sm:$0xf]
  %v1187 = vld [vmem:[%s1181 + $0x14] sm:$0xf]
  %v1188 = vld [vmem:[%s1181 + $0x18] sm:$0xf]
  %v1189 = vld [vmem:[%s1181 + $0x1c] sm:$0xf]
  %v1190 = vld [vmem:[%s1181 + $0x20] sm:$0xf]
  %v1191 = vld [vmem:[%s1181 + $0x24] sm:$0xf]
  %v1192 = vld [vmem:[%s1181 + $0x28] sm:$0xf]
  %v1193 = vld [vmem:[%s1181 + $0x2c] sm:$0xf]
  %v1194 = vld [vmem:[%s1181 + $0x30] sm:$0xf]
  %v1195 = vld [vmem:[%s1181 + $0x34] sm:$0xf]
  %v1196 = vld [vmem:[%s1181 + $0x38] sm:$0xf]
  %v1197 = vld [vmem:[%s1181 + $0x3c] sm:$0xf]
  %v1214 = vunpack.c.l.b16 %v1182
  %v1215 = vunpack.c.l.b16 %v1183
  %v1216 = vunpack.c.l.b16 %v1184
  %v1217 = vunpack.c.l.b16 %v1185
  %v1218 = vunpack.c.l.b16 %v1186
  %v1219 = vunpack.c.l.b16 %v1187
  %v1220 = vunpack.c.l.b16 %v1188
  %v1221 = vunpack.c.l.b16 %v1189
  %v1222 = vunpack.c.l.b16 %v1190
  %v1223 = vunpack.c.l.b16 %v1191
  %v1224 = vunpack.c.l.b16 %v1192
  %v1225 = vunpack.c.l.b16 %v1193
  %v1226 = vunpack.c.l.b16 %v1194
  %v1227 = vunpack.c.l.b16 %v1195
  %v1228 = vunpack.c.l.b16 %v1196
  %v1229 = vunpack.c.l.b16 %v1197
  %v1230 = vpack.c.b16 %v1215, %v1214
  %v1231 = vpack.c.b16 %v1217, %v1216
  %v1232 = vpack.c.b16 %v1219, %v1218
  %v1233 = vpack.c.b16 %v1221, %v1220
  %v1234 = vpack.c.b16 %v1223, %v1222
  %v1235 = vpack.c.b16 %v1225, %v1224
  %v1236 = vpack.c.b16 %v1227, %v1226
  %v1237 = vpack.c.b16 %v1229, %v1228
  %1246 = vmatprep.subr.bf16.mxu0 0
  %1247 = vmatpush1.bf16.msra.mxu0 %v1230
  %1248 = vmatprep.subr.bf16.mxu0 0
  %1249 = vmatpush1.bf16.msra.mxu0 %v1231
  %1250 = vmatprep.subr.bf16.mxu0 0
  %1251 = vmatpush1.bf16.msra.mxu0 %v1232
  %1252 = vmatprep.subr.bf16.mxu0 0
  %1253 = vmatpush1.bf16.msra.mxu0 %v1233
  %1254 = vmatprep.subr.bf16.mxu0 0
  %1255 = vmatpush1.bf16.msra.mxu0 %v1234
  %1256 = vmatprep.subr.bf16.mxu0 0
  %1257 = vmatpush1.bf16.msra.mxu0 %v1235
  %1258 = vmatprep.subr.bf16.mxu0 0
  %1259 = vmatpush1.bf16.msra.mxu0 %v1236
  %1260 = vmatprep.subr.bf16.mxu0 0
  %1261 = vmatpush1.bf16.msra.mxu0 %v1237
  %1262 = vmatprep.subr.bf16.mxu0 0
  %1263 = vmatpush1.bf16.msra.mxu0 0
  %1264 = vmatprep.subr.bf16.mxu0 0
  %1265 = vmatpush1.bf16.msra.mxu0 0
  %1266 = vmatprep.subr.bf16.mxu0 0
  %1267 = vmatpush1.bf16.msra.mxu0 0
  %1268 = vmatprep.subr.bf16.mxu0 0
  %1269 = vmatpush1.bf16.msra.mxu0 0
  %1270 = vmatprep.subr.bf16.mxu0 0
  %1271 = vmatpush1.bf16.msra.mxu0 0
  %1272 = vmatprep.subr.bf16.mxu0 0
  %1273 = vmatpush1.bf16.msra.mxu0 0
  %1274 = vmatprep.subr.bf16.mxu0 0
  %1275 = vmatpush1.bf16.msra.mxu0 0
  %1276 = vmatprep.subr.bf16.mxu0 0
  %1277 = vmatpush1.bf16.msra.mxu0 0
  %1278 = vmatprep.mubr.bf16.mxu0 0
  %1279 = vmatmul.mubr.bf16.gmra.mrb[0].mxu0 %v1179
  %v1280 = vpop.f32.mrb[0].mxu0
  %v1281 = vadd.f32 0.0, %v1280
  %v1282 = vpop.f32.mrb[0].mxu0
  %v1283 = vpop.f32.mrb[0].mxu0
  %v1284 = vadd.f32 0.0, %v1283
  %v1285 = vpop.f32.mrb[0].mxu0
  %1286 = vmatprep.mubr.bf16.mxu0 0
  %1287 = vmatmul.mubr.bf16.gmra.mrb[0].mxu0 %v1180
  %v1288 = vpop.f32.mrb[0].mxu0
  %v1289 = vadd.f32 0.0, %v1288
  %v1290 = vpop.f32.mrb[0].mxu0
  %v1291 = vpop.f32.mrb[0].mxu0
  %v1292 = vadd.f32 0.0, %v1291
  %v1293 = vpop.f32.mrb[0].mxu0
  %1294 = vdwg.mxu0
  %v1295 = vadd.f32 %v1161, %v1281
  %v1296 = vadd.f32 %v1164, %v1284
  %v1297 = vadd.f32 %v1169, %v1289
  %v1298 = vadd.f32 %v1172, %v1292
  %v1299 = vadd.f32 %v1295, %v1296
  %v1300 = vadd.f32 %v1299, %v1297
  %v1301 = vadd.f32 %v1300, %v1298
  %v1302 = vrot.slane %v1301, 4
  %v1303 = vadd.f32 %v1301, %v1302
  %v1304 = vrot.slane %v1303, 2
  %v1305 = vadd.f32 %v1303, %v1304
  %v1306 = vrot.slane %v1305, 1
  %v1307 = vadd.f32 %v1305, %v1306
  %v1308 = vmul.f32 %v1295, %v1295
  %v1309 = vmul.f32 %v1296, %v1296
  %v1310 = vmul.f32 %v1297, %v1297
  %v1311 = vmul.f32 %v1298, %v1298
  %v1312 = vadd.f32 %v1308, %v1309
  %v1313 = vadd.f32 %v1312, %v1310
  %v1314 = vadd.f32 %v1313, %v1311
  %v1315 = vrot.slane %v1314, 4
  %v1316 = vadd.f32 %v1314, %v1315
  %v1317 = vrot.slane %v1316, 2
  %v1318 = vadd.f32 %v1316, %v1317
  %v1319 = vrot.slane %v1318, 1
  %v1320 = vadd.f32 %v1318, %v1319
  %1321 = vmatprep.subr.mxu0 0.0
  %1322 = vmatpush1.msra.mxu0 %v267
  %1323 = vmatprep.subr.mxu0 0.0
  %1324 = vmatpush1.msra.mxu0 %v268
  %1325 = vmatprep.subr.mxu0 0.0
  %1326 = vmatpush1.msra.mxu0 %v269
  %1327 = vmatprep.subr.mxu0 0.0
  %1328 = vmatpush1.msra.mxu0 %v270
  %1329 = vmatprep.subr.mxu0 0.0
  %1330 = vmatpush1.msra.mxu0 %v271
  %1331 = vmatprep.subr.mxu0 0.0
  %1332 = vmatpush1.msra.mxu0 %v272
  %1333 = vmatprep.subr.mxu0 0.0
  %1334 = vmatpush1.msra.mxu0 %v273
  %1335 = vmatprep.subr.mxu0 0.0
  %1336 = vmatpush1.msra.mxu0 %v274
  %1337 = vmatprep.subr.mxu0 0.0
  %1338 = vmatpush1.msra.mxu0 %v275
  %1339 = vmatprep.subr.mxu0 0.0
  %1340 = vmatpush1.msra.mxu0 %v276
  %1341 = vmatprep.subr.mxu0 0.0
  %1342 = vmatpush1.msra.mxu0 %v277
  %1343 = vmatprep.subr.mxu0 0.0
  %1344 = vmatpush1.msra.mxu0 %v278
  %1345 = vmatprep.subr.mxu0 0.0
  %1346 = vmatpush1.msra.mxu0 %v279
  %1347 = vmatprep.subr.mxu0 0.0
  %1348 = vmatpush1.msra.mxu0 %v280
  %1349 = vmatprep.subr.mxu0 0.0
  %1350 = vmatpush1.msra.mxu0 %v281
  %1351 = vmatprep.subr.mxu0 0.0
  %1352 = vmatpush1.msra.mxu0 %v282
  %1353 = vmatprep.subr.mxu0 0.0
  %1354 = vmatpush1.msra.mxu0 0.0
  %1355 = vmatprep.subr.mxu0 0.0
  %1356 = vmatpush1.msra.mxu0 0.0
  %1357 = vmatprep.subr.mxu0 0.0
  %1358 = vmatpush1.msra.mxu0 0.0
  %1359 = vmatprep.subr.mxu0 0.0
  %1360 = vmatpush1.msra.mxu0 0.0
  %1361 = vmatprep.subr.mxu0 0.0
  %1362 = vmatpush1.msra.mxu0 0.0
  %1363 = vmatprep.subr.mxu0 0.0
  %1364 = vmatpush1.msra.mxu0 0.0
  %1365 = vmatprep.subr.mxu0 0.0
  %1366 = vmatpush1.msra.mxu0 0.0
  %1367 = vmatprep.subr.mxu0 0.0
  %1368 = vmatpush1.msra.mxu0 0.0
  %1369 = vmatprep.subr.mxu0 0.0
  %1370 = vmatpush1.msra.mxu0 0.0
  %1371 = vmatprep.subr.mxu0 0.0
  %1372 = vmatpush1.msra.mxu0 0.0
  %1373 = vmatprep.subr.mxu0 0.0
  %1374 = vmatpush1.msra.mxu0 0.0
  %1375 = vmatprep.subr.mxu0 0.0
  %1376 = vmatpush1.msra.mxu0 0.0
  %1377 = vmatprep.subr.mxu0 0.0
  %1378 = vmatpush1.msra.mxu0 0.0
  %1379 = vmatprep.subr.mxu0 0.0
  %1380 = vmatpush1.msra.mxu0 0.0
  %1381 = vmatprep.subr.mxu0 0.0
  %1382 = vmatpush1.msra.mxu0 0.0
  %1383 = vmatprep.subr.mxu0 0.0
  %1384 = vmatpush1.msra.mxu0 0.0
  %1385 = vmatprep.mubr.f32.mxu0 0.0
  %1386 = vmatmul.mubr.f32.gmra.mrb[0].mxu0 %v1307
  %v1387 = vpop.f32.mrb[0].mxu0
  %v1388 = vadd.f32 0.0, %v1387
  %v1389 = vpop.f32.mrb[0].mxu0
  %1390 = vdwg.mxu0
  %1391 = vmatprep.subr.mxu0 0.0
  %1392 = vmatpush1.msra.mxu0 %v267
  %1393 = vmatprep.subr.mxu0 0.0
  %1394 = vmatpush1.msra.mxu0 %v268
  %1395 = vmatprep.subr.mxu0 0.0
  %1396 = vmatpush1.msra.mxu0 %v269
  %1397 = vmatprep.subr.mxu0 0.0
  %1398 = vmatpush1.msra.mxu0 %v270
  %1399 = vmatprep.subr.mxu0 0.0
  %1400 = vmatpush1.msra.mxu0 %v271
  %1401 = vmatprep.subr.mxu0 0.0
  %1402 = vmatpush1.msra.mxu0 %v272
  %1403 = vmatprep.subr.mxu0 0.0
  %1404 = vmatpush1.msra.mxu0 %v273
  %1405 = vmatprep.subr.mxu0 0.0
  %1406 = vmatpush1.msra.mxu0 %v274
  %1407 = vmatprep.subr.mxu0 0.0
  %1408 = vmatpush1.msra.mxu0 %v275
  %1409 = vmatprep.subr.mxu0 0.0
  %1410 = vmatpush1.msra.mxu0 %v276
  %1411 = vmatprep.subr.mxu0 0.0
  %1412 = vmatpush1.msra.mxu0 %v277
  %1413 = vmatprep.subr.mxu0 0.0
  %1414 = vmatpush1.msra.mxu0 %v278
  %1415 = vmatprep.subr.mxu0 0.0
  %1416 = vmatpush1.msra.mxu0 %v279
  %1417 = vmatprep.subr.mxu0 0.0
  %1418 = vmatpush1.msra.mxu0 %v280
  %1419 = vmatprep.subr.mxu0 0.0
  %1420 = vmatpush1.msra.mxu0 %v281
  %1421 = vmatprep.subr.mxu0 0.0
  %1422 = vmatpush1.msra.mxu0 %v282
  %1423 = vmatprep.subr.mxu0 0.0
  %1424 = vmatpush1.msra.mxu0 0.0
  %1425 = vmatprep.subr.mxu0 0.0
  %1426 = vmatpush1.msra.mxu0 0.0
  %1427 = vmatprep.subr.mxu0 0.0
  %1428 = vmatpush1.msra.mxu0 0.0
  %1429 = vmatprep.subr.mxu0 0.0
  %1430 = vmatpush1.msra.mxu0 0.0
  %1431 = vmatprep.subr.mxu0 0.0
  %1432 = vmatpush1.msra.mxu0 0.0
  %1433 = vmatprep.subr.mxu0 0.0
  %1434 = vmatpush1.msra.mxu0 0.0
  %1435 = vmatprep.subr.mxu0 0.0
  %1436 = vmatpush1.msra.mxu0 0.0
  %1437 = vmatprep.subr.mxu0 0.0
  %1438 = vmatpush1.msra.mxu0 0.0
  %1439 = vmatprep.subr.mxu0 0.0
  %1440 = vmatpush1.msra.mxu0 0.0
  %1441 = vmatprep.subr.mxu0 0.0
  %1442 = vmatpush1.msra.mxu0 0.0
  %1443 = vmatprep.subr.mxu0 0.0
  %1444 = vmatpush1.msra.mxu0 0.0
  %1445 = vmatprep.subr.mxu0 0.0
  %1446 = vmatpush1.msra.mxu0 0.0
  %1447 = vmatprep.subr.mxu0 0.0
  %1448 = vmatpush1.msra.mxu0 0.0
  %1449 = vmatprep.subr.mxu0 0.0
  %1450 = vmatpush1.msra.mxu0 0.0
  %1451 = vmatprep.subr.mxu0 0.0
  %1452 = vmatpush1.msra.mxu0 0.0
  %1453 = vmatprep.subr.mxu0 0.0
  %1454 = vmatpush1.msra.mxu0 0.0
  %1455 = vmatprep.mubr.f32.mxu0 0.0
  %1456 = vmatmul.mubr.f32.gmra.mrb[0].mxu0 %v1320
  %v1457 = vpop.f32.mrb[0].mxu0
  %v1458 = vadd.f32 0.0, %v1457
  %v1459 = vpop.f32.mrb[0].mxu0
  %1460 = vdwg.mxu0
  %v1461 = vmul.f32 %v1388, %v747
  %v1462 = vmul.f32 %v1458, %v747
  %v1463 = vmul.f32 %v1461, %v1461
  %v1464 = vsub.f32 %v1462, %v1463
  %v1465 = vadd.f32 %v1464, 1e-05
  %v1466 = vrsqrt.pop %v1465
  %v1468 = vrot.slane %v1466, 6
  %v1470 = vmul.f32 %v298, %v1468
  %v1472 = vrot.slane %v1470, 2
  %v1474 = vmul.f32 %v1461, %v1472
  %v1476 = vrot.slane %v1474, 5
  %v1478 = vsub.f32 %v298, %v1476
  %v1479 = vsel %vm760, %v1472, 0
  %1481 = vmatprep.subr.mxu0 0.0
  %1482 = vmatpush1.msra.mxu0 %v297
  %1483 = vmatprep.subr.mxu0 0.0
  %1484 = vmatpush1.msra.mxu0 0.0
  %1485 = vmatprep.subr.mxu0 0.0
  %1486 = vmatpush1.msra.mxu0 0.0
  %1487 = vmatprep.subr.mxu0 0.0
  %1488 = vmatpush1.msra.mxu0 0.0
  %1489 = vmatprep.subr.mxu0 0.0
  %1490 = vmatpush1.msra.mxu0 0.0
  %1491 = vmatprep.subr.mxu0 0.0
  %1492 = vmatpush1.msra.mxu0 0.0
  %1493 = vmatprep.subr.mxu0 0.0
  %1494 = vmatpush1.msra.mxu0 0.0
  %1495 = vmatprep.subr.mxu0 0.0
  %1496 = vmatpush1.msra.mxu0 0.0
  %1497 = vmatprep.subr.mxu0 0.0
  %1498 = vmatpush1.msra.mxu0 0.0
  %1499 = vmatprep.subr.mxu0 0.0
  %1500 = vmatpush1.msra.mxu0 0.0
  %1501 = vmatprep.subr.mxu0 0.0
  %1502 = vmatpush1.msra.mxu0 0.0
  %1503 = vmatprep.subr.mxu0 0.0
  %1504 = vmatpush1.msra.mxu0 0.0
  %1505 = vmatprep.subr.mxu0 0.0
  %1506 = vmatpush1.msra.mxu0 0.0
  %1507 = vmatprep.subr.mxu0 0.0
  %1508 = vmatpush1.msra.mxu0 0.0
  %1509 = vmatprep.subr.mxu0 0.0
  %1510 = vmatpush1.msra.mxu0 0.0
  %1511 = vmatprep.subr.mxu0 0.0
  %1512 = vmatpush1.msra.mxu0 0.0
  %1513 = vmatprep.subr.mxu0 0.0
  %1514 = vmatpush1.msra.mxu0 0.0
  %1515 = vmatprep.subr.mxu0 0.0
  %1516 = vmatpush1.msra.mxu0 0.0
  %1517 = vmatprep.subr.mxu0 0.0
  %1518 = vmatpush1.msra.mxu0 0.0
  %1519 = vmatprep.subr.mxu0 0.0
  %1520 = vmatpush1.msra.mxu0 0.0
  %1521 = vmatprep.subr.mxu0 0.0
  %1522 = vmatpush1.msra.mxu0 0.0
  %1523 = vmatprep.subr.mxu0 0.0
  %1524 = vmatpush1.msra.mxu0 0.0
  %1525 = vmatprep.subr.mxu0 0.0
  %1526 = vmatpush1.msra.mxu0 0.0
  %1527 = vmatprep.subr.mxu0 0.0
  %1528 = vmatpush1.msra.mxu0 0.0
  %1529 = vmatprep.subr.mxu0 0.0
  %1530 = vmatpush1.msra.mxu0 0.0
  %1531 = vmatprep.subr.mxu0 0.0
  %1532 = vmatpush1.msra.mxu0 0.0
  %1533 = vmatprep.subr.mxu0 0.0
  %1534 = vmatpush1.msra.mxu0 0.0
  %1535 = vmatprep.subr.mxu0 0.0
  %1536 = vmatpush1.msra.mxu0 0.0
  %1537 = vmatprep.subr.mxu0 0.0
  %1538 = vmatpush1.msra.mxu0 0.0
  %1539 = vmatprep.subr.mxu0 0.0
  %1540 = vmatpush1.msra.mxu0 0.0
  %1541 = vmatprep.subr.mxu0 0.0
  %1542 = vmatpush1.msra.mxu0 0.0
  %1543 = vmatprep.subr.mxu0 0.0
  %1544 = vmatpush1.msra.mxu0 0.0
  %1545 = vmatprep.mubr.f32.mxu0 0.0
  %1546 = vmatmul.mubr.f32.gmra.mrb[0].mxu0 %v1479
  %v1547 = vpop.f32.mrb[0].mxu0
  %v1548 = vadd.f32 0.0, %v1547
  %v1549 = vpop.f32.mrb[0].mxu0
  %1550 = vdwg.mxu0
  %v1552 = vrot.slane %v1478, 3
  %v1553 = vsel %vm760, %v1552, 0
  %1555 = vmatprep.subr.mxu0 0.0
  %1556 = vmatpush1.msra.mxu0 %v297
  %1557 = vmatprep.subr.mxu0 0.0
  %1558 = vmatpush1.msra.mxu0 0.0
  %1559 = vmatprep.subr.mxu0 0.0
  %1560 = vmatpush1.msra.mxu0 0.0
  %1561 = vmatprep.subr.mxu0 0.0
  %1562 = vmatpush1.msra.mxu0 0.0
  %1563 = vmatprep.subr.mxu0 0.0
  %1564 = vmatpush1.msra.mxu0 0.0
  %1565 = vmatprep.subr.mxu0 0.0
  %1566 = vmatpush1.msra.mxu0 0.0
  %1567 = vmatprep.subr.mxu0 0.0
  %1568 = vmatpush1.msra.mxu0 0.0
  %1569 = vmatprep.subr.mxu0 0.0
  %1570 = vmatpush1.msra.mxu0 0.0
  %1571 = vmatprep.subr.mxu0 0.0
  %1572 = vmatpush1.msra.mxu0 0.0
  %1573 = vmatprep.subr.mxu0 0.0
  %1574 = vmatpush1.msra.mxu0 0.0
  %1575 = vmatprep.subr.mxu0 0.0
  %1576 = vmatpush1.msra.mxu0 0.0
  %1577 = vmatprep.subr.mxu0 0.0
  %1578 = vmatpush1.msra.mxu0 0.0
  %1579 = vmatprep.subr.mxu0 0.0
  %1580 = vmatpush1.msra.mxu0 0.0
  %1581 = vmatprep.subr.mxu0 0.0
  %1582 = vmatpush1.msra.mxu0 0.0
  %1583 = vmatprep.subr.mxu0 0.0
  %1584 = vmatpush1.msra.mxu0 0.0
  %1585 = vmatprep.subr.mxu0 0.0
  %1586 = vmatpush1.msra.mxu0 0.0
  %1587 = vmatprep.subr.mxu0 0.0
  %1588 = vmatpush1.msra.mxu0 0.0
  %1589 = vmatprep.subr.mxu0 0.0
  %1590 = vmatpush1.msra.mxu0 0.0
  %1591 = vmatprep.subr.mxu0 0.0
  %1592 = vmatpush1.msra.mxu0 0.0
  %1593 = vmatprep.subr.mxu0 0.0
  %1594 = vmatpush1.msra.mxu0 0.0
  %1595 = vmatprep.subr.mxu0 0.0
  %1596 = vmatpush1.msra.mxu0 0.0
  %1597 = vmatprep.subr.mxu0 0.0
  %1598 = vmatpush1.msra.mxu0 0.0
  %1599 = vmatprep.subr.mxu0 0.0
  %1600 = vmatpush1.msra.mxu0 0.0
  %1601 = vmatprep.subr.mxu0 0.0
  %1602 = vmatpush1.msra.mxu0 0.0
  %1603 = vmatprep.subr.mxu0 0.0
  %1604 = vmatpush1.msra.mxu0 0.0
  %1605 = vmatprep.subr.mxu0 0.0
  %1606 = vmatpush1.msra.mxu0 0.0
  %1607 = vmatprep.subr.mxu0 0.0
  %1608 = vmatpush1.msra.mxu0 0.0
  %1609 = vmatprep.subr.mxu0 0.0
  %1610 = vmatpush1.msra.mxu0 0.0
  %1611 = vmatprep.subr.mxu0 0.0
  %1612 = vmatpush1.msra.mxu0 0.0
  %1613 = vmatprep.subr.mxu0 0.0
  %1614 = vmatpush1.msra.mxu0 0.0
  %1615 = vmatprep.subr.mxu0 0.0
  %1616 = vmatpush1.msra.mxu0 0.0
  %1617 = vmatprep.subr.mxu0 0.0
  %1618 = vmatpush1.msra.mxu0 0.0
  %1619 = vmatprep.mubr.f32.mxu0 0.0
  %1620 = vmatmul.mubr.f32.gmra.mrb[0].mxu0 %v1553
  %v1621 = vpop.f32.mrb[0].mxu0
  %v1622 = vadd.f32 0.0, %v1621
  %v1623 = vpop.f32.mrb[0].mxu0
  %1624 = vdwg.mxu0
  %v1625 = vlaneseq
  %v1626 = vshrl.u32 %v1625, 7
  %v1627 = vsub.s32 0, %v1626
  %v1628 = vrot.slane %v1548, %v1627
  %v1629 = vmul.f32 %v1295, %v1628
  %v1630 = vmul.f32 %v1296, %v1628
  %v1631 = vmul.f32 %v1297, %v1628
  %v1632 = vmul.f32 %v1298, %v1628
  %v1633 = vlaneseq
  %v1634 = vshrl.u32 %v1633, 7
  %v1635 = vsub.s32 0, %v1634
  %v1636 = vrot.slane %v1622, %v1635
  %v1637 = vadd.f32 %v1629, %v1636
  %v1638 = vadd.f32 %v1630, %v1636
  %v1639 = vadd.f32 %v1631, %v1636
  %v1640 = vadd.f32 %v1632, %v1636
  %v1641 = vld [vmem:[%s0 + $0x1] sm:$0xff]
  %v1642 = vld [vmem:[%s0 + $0x9] sm:$0xff]
  %v1643 = vld [vmem:[%s0 + $0x19] sm:$0xff]
  %v1644 = vld [vmem:[%s0 + $0x21] sm:$0xff]
  %v1645 = vpack.c.bf16 %v1642, %v1641
  %v1646 = vpack.c.bf16 %v1644, %v1643
  %v1647 = vld [vmem:[%s3] sm:$0xf]
  %v1648 = vld [vmem:[%s3 + $0x4] sm:$0xf]
  %v1649 = vld [vmem:[%s3 + $0x8] sm:$0xf]
  %v1650 = vld [vmem:[%s3 + $0xc] sm:$0xf]
  %v1651 = vld [vmem:[%s3 + $0x10] sm:$0xf]
  %v1652 = vld [vmem:[%s3 + $0x14] sm:$0xf]
  %v1653 = vld [vmem:[%s3 + $0x18] sm:$0xf]
  %v1654 = vld [vmem:[%s3 + $0x1c] sm:$0xf]
  %v1655 = vld [vmem:[%s5] sm:$0x1]
  %v1657 = vlaneseq
  %v1658 = vshrl.u32 %v1657, 7
  %v1659 = vsub.s32 0, %v1658
  %v1660 = vrot.slane %v1655, %v1659
  %v1670 = vunpack.c.l.b16 %v1647
  %v1671 = vunpack.c.l.b16 %v1648
  %v1672 = vunpack.c.l.b16 %v1649
  %v1673 = vunpack.c.l.b16 %v1650
  %v1674 = vunpack.c.l.b16 %v1651
  %v1675 = vunpack.c.l.b16 %v1652
  %v1676 = vunpack.c.l.b16 %v1653
  %v1677 = vunpack.c.l.b16 %v1654
  %v1678 = vpack.c.b16 %v1671, %v1670
  %v1679 = vpack.c.b16 %v1673, %v1672
  %v1680 = vpack.c.b16 %v1675, %v1674
  %v1681 = vpack.c.b16 %v1677, %v1676
  %v1687 = vsel %vm352, %v1645, 0
  %v1690 = vsel %vm352, %v1646, 0
  %1692 = vmatprep.subr.bf16.mxu0 0
  %1693 = vmatpush1.bf16.msra.mxu0 %v1678
  %1694 = vmatprep.subr.bf16.mxu0 0
  %1695 = vmatpush1.bf16.msra.mxu0 %v1679
  %1696 = vmatprep.subr.bf16.mxu0 0
  %1697 = vmatpush1.bf16.msra.mxu0 %v1680
  %1698 = vmatprep.subr.bf16.mxu0 0
  %1699 = vmatpush1.bf16.msra.mxu0 %v1681
  %1700 = vmatprep.subr.bf16.mxu0 0
  %1701 = vmatpush1.bf16.msra.mxu0 0
  %1702 = vmatprep.subr.bf16.mxu0 0
  %1703 = vmatpush1.bf16.msra.mxu0 0
  %1704 = vmatprep.subr.bf16.mxu0 0
  %1705 = vmatpush1.bf16.msra.mxu0 0
  %1706 = vmatprep.subr.bf16.mxu0 0
  %1707 = vmatpush1.bf16.msra.mxu0 0
  %1708 = vmatprep.subr.bf16.mxu0 0
  %1709 = vmatpush1.bf16.msra.mxu0 0
  %1710 = vmatprep.subr.bf16.mxu0 0
  %1711 = vmatpush1.bf16.msra.mxu0 0
  %1712 = vmatprep.subr.bf16.mxu0 0
  %1713 = vmatpush1.bf16.msra.mxu0 0
  %1714 = vmatprep.subr.bf16.mxu0 0
  %1715 = vmatpush1.bf16.msra.mxu0 0
  %1716 = vmatprep.subr.bf16.mxu0 0
  %1717 = vmatpush1.bf16.msra.mxu0 0
  %1718 = vmatprep.subr.bf16.mxu0 0
  %1719 = vmatpush1.bf16.msra.mxu0 0
  %1720 = vmatprep.subr.bf16.mxu0 0
  %1721 = vmatpush1.bf16.msra.mxu0 0
  %1722 = vmatprep.subr.bf16.mxu0 0
  %1723 = vmatpush1.bf16.msra.mxu0 0
  %1724 = vmatprep.mubr.bf16.mxu0 0
  %1725 = vmatmul.mubr.bf16.gmra.mrb[0].mxu0 %v1687
  %v1726 = vpop.f32.mrb[0].mxu0
  %v1727 = vadd.f32 %v1660, %v1726
  %v1728 = vpop.f32.mrb[0].mxu0
  %v1729 = vpop.f32.mrb[0].mxu0
  %v1730 = vadd.f32 %v1660, %v1729
  %v1731 = vpop.f32.mrb[0].mxu0
  %1732 = vmatprep.mubr.bf16.mxu0 0
  %1733 = vmatmul.mubr.bf16.gmra.mrb[0].mxu0 %v1690
  %v1734 = vpop.f32.mrb[0].mxu0
  %v1735 = vadd.f32 %v1660, %v1734
  %v1736 = vpop.f32.mrb[0].mxu0
  %v1737 = vpop.f32.mrb[0].mxu0
  %v1738 = vadd.f32 %v1660, %v1737
  %v1739 = vpop.f32.mrb[0].mxu0
  %1740 = vdwg.mxu0
  %v1741 = vadd.f32 %v1637, %v1727
  %v1742 = vadd.f32 %v1638, %v1730
  %v1743 = vadd.f32 %v1639, %v1735
  %v1744 = vadd.f32 %v1640, %v1738
  %v1745 = vmax.f32 %v1741, 0.0
  %v1746 = vmax.f32 %v1742, 0.0
  %v1747 = vmax.f32 %v1743, 0.0
  %v1748 = vmax.f32 %v1744, 0.0
  %1749 = vst [vmem:[%s6] sm:$0xff] %v1745
  %1750 = vst [vmem:[%s6 + $0x8] sm:$0xff] %v1746
  %1751 = vst [vmem:[%s6 + $0x10] sm:$0xff] %v1747
  %1752 = vst [vmem:[%s6 + $0x18] sm:$0xff] %v1748
  // Predicated region
  $region26: #{residual_block_pallas.1} parent=0 // pred_check
    _
  $region27: #{residual_block_pallas.1} parent=0 // pred_check_branch
    %1754 = sbr.rel (0) target = $region29
  $region28: #{residual_block_pallas.1} parent=0 // pred_region
    _
  $region29: #{residual_block_pallas.1} parent=0 // pred_fallthru
    _
  // Predicated region
  $region30: #{residual_block_pallas.1} parent=0 // pred_check
    _
  $region31: #{residual_block_pallas.1} parent=0 // pred_check_branch
    %1756 = sbr.rel (0) target = $region33
  $region32: #{residual_block_pallas.1} parent=0 // pred_region
    _
  $region33: #{residual_block_pallas.1} parent=0 // pred_fallthru
    _

</llo_original>
